<compile_context>
chip_gen: v7x
topology: tpu7x:2x2x1
jax: 0.10.0
libtpu: 0.0.40
codegen_flags: <defaults>
</compile_context>

<pallas_src>
import math

import jax
import jax.numpy as jnp
from jax.experimental import pallas as pl
from jax.experimental.pallas import tpu as pltpu


def lstm_regression_forward(x, w_ih, w_hh, b_ih, b_hh, *, time_step=15):
    """x: (B, I) float32. Weights in PyTorch LSTMCell layout:
       w_ih (4H, I), w_hh (4H, H), b_ih (4H,), b_hh (4H,).
       Returns (time_step, B, H) float32."""
    B, I = x.shape
    H4 = w_ih.shape[0]
    H = H4 // 4
    T = time_step

    # Pad batch to a full sublane (multiple of 8); slice back afterwards.
    B_pad = max(8, ((B + 7) // 8) * 8)
    # Pad T so the packed output width T_pad*H is a multiple of 128 lanes.
    tfac = 128 // math.gcd(128, H)
    T_pad = ((T + tfac - 1) // tfac) * tfac

    x_pad = jnp.zeros((B_pad, I), jnp.float32).at[:B].set(
        jnp.asarray(x, jnp.float32))

    w_ih_t = jnp.asarray(w_ih, jnp.float32).T                     # (I, 4H)
    w_hh_t = jnp.asarray(w_hh, jnp.float32).T                     # (H, 4H)
    bias = (jnp.asarray(b_ih, jnp.float32)
            + jnp.asarray(b_hh, jnp.float32)).reshape(1, 4 * H)   # (1, 4H)

    # Pre-scale the g-gate columns by 2 so tanh(z) = 2*sigmoid(2z) - 1 can be
    # recovered from a single full-width sigmoid pass in the kernel.
    gate_scale = jnp.ones((1, 4 * H), jnp.float32).at[:, 2 * H:3 * H].set(2.0)
    w_ih_t = w_ih_t * gate_scale
    w_hh_t = w_hh_t * gate_scale
    bias = bias * gate_scale

    # Recurrent weight as bf16 MXU operand (exact *2 scaling stays exact).
    w_hh_bf = w_hh_t.astype(jnp.bfloat16)                         # (H, 4H)

    def kernel(x_ref, w_ih_ref, w_hh_ref, b_ref, out_ref):
        # Time-invariant part of the gates, computed once (bias folded in).
        # Off the serial chain -> keep f32 operands for accuracy.
        xw = jnp.dot(x_ref[...], w_ih_ref[...],
                     preferred_element_type=jnp.float32) + b_ref[...]

        # Loaded once; Mosaic keeps the RHS resident across the unrolled loop.
        w_hh_k = w_hh_ref[...]                                    # bf16

        hx = jnp.full((B_pad, H), 0.01, jnp.float32)
        cx = jnp.full((B_pad, H), 0.01, jnp.float32)

        hs = []
        # Fully unrolled recurrence (T is small, static).
        for _ in range(T):
            gates = xw + jnp.dot(hx.astype(jnp.bfloat16), w_hh_k,
                                 preferred_element_type=jnp.float32)

            # Single full-width EUP pass over the (B, 4H) vreg.
            sig = jax.nn.sigmoid(gates)
            i_g = sig[:, 0 * H:1 * H]
            f_g = sig[:, 1 * H:2 * H]
            g_g = 2.0 * sig[:, 2 * H:3 * H] - 1.0   # == tanh(z_g), pre-scaled
            o_g = sig[:, 3 * H:4 * H]

            cx = f_g * cx + i_g * g_g
            hx = o_g * jnp.tanh(cx)
            hs.append(hx)

        # Pad to T_pad steps and write one lane-dense (B_pad, T_pad*H) slab:
        # 4 unmasked 128-lane stores instead of T masked 32-lane stores.
        for _ in range(T_pad - T):
            hs.append(jnp.zeros_like(hx))
        out_ref[...] = jnp.concatenate(hs, axis=-1)

    out_pad = pl.pallas_call(
        kernel,
        out_shape=jax.ShapeDtypeStruct((B_pad, T_pad * H), jnp.float32),
        grid_spec=pltpu.PrefetchScalarGridSpec(
            num_scalar_prefetch=0,
            grid=(1,),   # single grid step; recurrence is fused in-kernel
            in_specs=[
                pl.BlockSpec((B_pad, I), lambda i: (0, 0)),
                pl.BlockSpec((I, 4 * H), lambda i: (0, 0)),
                pl.BlockSpec((H, 4 * H), lambda i: (0, 0)),
                pl.BlockSpec((1, 4 * H), lambda i: (0, 0)),
            ],
            out_specs=pl.BlockSpec((B_pad, T_pad * H), lambda i: (0, 0)),
        ),
        compiler_params=pltpu.CompilerParams(
            # Time recurrence is sequential and carried in one invocation.
            dimension_semantics=("arbitrary",)),
    )(x_pad, w_ih_t, w_hh_bf, bias)

    # (B_pad, T_pad*H) -> (T, B, H)
    out = out_pad.reshape(B_pad, T_pad, H).transpose(1, 0, 2)
    return out[:T, :B, :]


def _reference(x, w_ih, w_hh, b_ih, b_hh, time_step):
    B = x.shape[0]
    H = w_hh.shape[1]
    hx = jnp.full((B, H), 0.01, jnp.float32)
    cx = jnp.full((B, H), 0.01, jnp.float32)
    outs = []
    for _ in range(time_step):
        gates = x @ w_ih.T + hx @ w_hh.T + b_ih + b_hh
        i, f, g, o = jnp.split(gates, 4, axis=-1)
        i, f, o = jax.nn.sigmoid(i), jax.nn.sigmoid(f), jax.nn.sigmoid(o)
        g = jnp.tanh(g)
        cx = f * cx + i * g
        hx = o * jnp.tanh(cx)
        outs.append(hx)
    return jnp.stack(outs, axis=0)


if __name__ == "__main__":
    B, I, H, T = 2, 16, 32, 15

    key = jax.random.PRNGKey(0)
    k1, k2, k3, k4, k5 = jax.random.split(key, 5)
    bound = 1.0 / math.sqrt(H)
    w_ih = jax.random.uniform(k1, (4 * H, I), jnp.float32, -bound, bound)
    w_hh = jax.random.uniform(k2, (4 * H, H), jnp.float32, -bound, bound)
    b_ih = jax.random.uniform(k3, (4 * H,), jnp.float32, -bound, bound)
    b_hh = jax.random.uniform(k4, (4 * H,), jnp.float32, -bound, bound)
    x = jax.random.normal(k5, (B, I), jnp.float32)

    out = lstm_regression_forward(x, w_ih, w_hh, b_ih, b_hh, time_step=T)
    out = jax.block_until_ready(out)

    ref = _reference(x, w_ih, w_hh, b_ih, b_hh, T)
    assert out.shape == (T, B, H)
    # bf16 MXU operands on the recurrent matmul -> relaxed tolerance
    # (f32 reference; accumulated error over 15 steps is ~1e-3..1e-2).
    assert jnp.allclose(out, ref, atol=3e-2, rtol=3e-2), \
        float(jnp.max(jnp.abs(out - ref)))

    print("KERNEL_OK")
</pallas_src>

<mosaic_0001>
module attributes {stable_mosaic.version = 11 : i64} {
  func.func @kernel(%arg0: i32, %arg1: memref<8x16xf32, #tpu.memory_space<vmem>>, %arg2: memref<16x128xf32, #tpu.memory_space<vmem>>, %arg3: memref<32x128xbf16, #tpu.memory_space<vmem>>, %arg4: memref<1x128xf32, #tpu.memory_space<vmem>>, %arg5: memref<8x512xf32, #tpu.memory_space<vmem>>) attributes {dimension_semantics = [#tpu.dimension_semantics<arbitrary>], iteration_bounds = array<i64: 1>, scalar_prefetch = 0 : i64, scratch_operands = 0 : i64, tpu.core_type = #tpu.core_type<tc>, window_params = [{pipeline_mode = #tpu.pipeline_mode<synchronous>, transform_indices = @transform_0, window_bounds = array<i64: 8, 16>}, {pipeline_mode = #tpu.pipeline_mode<synchronous>, transform_indices = @transform_1, window_bounds = array<i64: 16, 128>}, {pipeline_mode = #tpu.pipeline_mode<synchronous>, transform_indices = @transform_2, window_bounds = array<i64: 32, 128>}, {pipeline_mode = #tpu.pipeline_mode<synchronous>, transform_indices = @transform_3, window_bounds = array<i64: 1, 128>}, {pipeline_mode = #tpu.pipeline_mode<synchronous>, transform_indices = @transform_4, window_bounds = array<i64: 8, 512>}]} {
    %c0 = arith.constant 0 : index
    %c0_0 = arith.constant 0 : index
    %0 = vector.load %arg1[%c0, %c0_0] : memref<8x16xf32, #tpu.memory_space<vmem>>, vector<8x16xf32>
    %c0_1 = arith.constant 0 : index
    %c0_2 = arith.constant 0 : index
    %1 = vector.load %arg2[%c0_1, %c0_2] : memref<16x128xf32, #tpu.memory_space<vmem>>, vector<16x128xf32>
    %cst = arith.constant dense<0.000000e+00> : vector<8x128xf32>
    %2 = tpu.matmul %0, %1, %cst {dimension_numbers = #tpu.dot_dimension_numbers<[1], [0], [0], [1], [0, 0, 1, 1], [], []>} : vector<8x16xf32>, vector<16x128xf32>, vector<8x128xf32> -> vector<8x128xf32>
    %c0_3 = arith.constant 0 : index
    %c0_4 = arith.constant 0 : index
    %3 = vector.load %arg4[%c0_3, %c0_4] : memref<1x128xf32, #tpu.memory_space<vmem>>, vector<1x128xf32>
    %4 = vector.broadcast %3 : vector<1x128xf32> to vector<8x128xf32>
    %5 = arith.addf %2, %4 : vector<8x128xf32>
    %c0_5 = arith.constant 0 : index
    %c0_6 = arith.constant 0 : index
    %6 = vector.load %arg3[%c0_5, %c0_6] : memref<32x128xbf16, #tpu.memory_space<vmem>>, vector<32x128xbf16>
    %cst_7 = arith.constant 0.00999999977 : f32
    %7 = vector.broadcast %cst_7 : f32 to vector<8x32xf32>
    %cst_8 = arith.constant 0.00999999977 : f32
    %8 = vector.broadcast %cst_8 : f32 to vector<8x32xf32>
    %9 = arith.truncf %7 : vector<8x32xf32> to vector<8x32xbf16>
    %cst_9 = arith.constant dense<0.000000e+00> : vector<8x128xf32>
    %10 = tpu.matmul %9, %6, %cst_9 {dimension_numbers = #tpu.dot_dimension_numbers<[1], [0], [0], [1], [0, 0, 1, 1], [], []>} : vector<8x32xbf16>, vector<32x128xbf16>, vector<8x128xf32> -> vector<8x128xf32>
    %11 = arith.addf %5, %10 : vector<8x128xf32>
    %12 = arith.negf %11 : vector<8x128xf32>
    %13 = math.exp %12 : vector<8x128xf32>
    %cst_10 = arith.constant 1.000000e+00 : f32
    %14 = vector.broadcast %cst_10 : f32 to vector<8x128xf32>
    %15 = arith.addf %14, %13 : vector<8x128xf32>
    %16 = arith.divf %14, %15 : vector<8x128xf32>
    %17 = vector.extract_strided_slice %16 {offsets = [0, 0], sizes = [8, 32], strides = [1, 1]} : vector<8x128xf32> to vector<8x32xf32>
    %18 = vector.extract_strided_slice %16 {offsets = [0, 32], sizes = [8, 32], strides = [1, 1]} : vector<8x128xf32> to vector<8x32xf32>
    %19 = vector.extract_strided_slice %16 {offsets = [0, 64], sizes = [8, 32], strides = [1, 1]} : vector<8x128xf32> to vector<8x32xf32>
    %cst_11 = arith.constant 2.000000e+00 : f32
    %20 = vector.broadcast %cst_11 : f32 to vector<8x32xf32>
    %21 = arith.mulf %20, %19 : vector<8x32xf32>
    %cst_12 = arith.constant 1.000000e+00 : f32
    %22 = vector.broadcast %cst_12 : f32 to vector<8x32xf32>
    %23 = arith.subf %21, %22 : vector<8x32xf32>
    %24 = vector.extract_strided_slice %16 {offsets = [0, 96], sizes = [8, 32], strides = [1, 1]} : vector<8x128xf32> to vector<8x32xf32>
    %25 = arith.mulf %18, %8 : vector<8x32xf32>
    %26 = arith.mulf %17, %23 : vector<8x32xf32>
    %27 = arith.addf %25, %26 : vector<8x32xf32>
    %28 = math.tanh %27 : vector<8x32xf32>
    %29 = arith.mulf %24, %28 : vector<8x32xf32>
    %30 = arith.truncf %29 : vector<8x32xf32> to vector<8x32xbf16>
    %cst_13 = arith.constant dense<0.000000e+00> : vector<8x128xf32>
    %31 = tpu.matmul %30, %6, %cst_13 {dimension_numbers = #tpu.dot_dimension_numbers<[1], [0], [0], [1], [0, 0, 1, 1], [], []>} : vector<8x32xbf16>, vector<32x128xbf16>, vector<8x128xf32> -> vector<8x128xf32>
    %32 = arith.addf %5, %31 : vector<8x128xf32>
    %33 = arith.negf %32 : vector<8x128xf32>
    %34 = math.exp %33 : vector<8x128xf32>
    %cst_14 = arith.constant 1.000000e+00 : f32
    %35 = vector.broadcast %cst_14 : f32 to vector<8x128xf32>
    %36 = arith.addf %35, %34 : vector<8x128xf32>
    %37 = arith.divf %35, %36 : vector<8x128xf32>
    %38 = vector.extract_strided_slice %37 {offsets = [0, 0], sizes = [8, 32], strides = [1, 1]} : vector<8x128xf32> to vector<8x32xf32>
    %39 = vector.extract_strided_slice %37 {offsets = [0, 32], sizes = [8, 32], strides = [1, 1]} : vector<8x128xf32> to vector<8x32xf32>
    %40 = vector.extract_strided_slice %37 {offsets = [0, 64], sizes = [8, 32], strides = [1, 1]} : vector<8x128xf32> to vector<8x32xf32>
    %cst_15 = arith.constant 2.000000e+00 : f32
    %41 = vector.broadcast %cst_15 : f32 to vector<8x32xf32>
    %42 = arith.mulf %41, %40 : vector<8x32xf32>
    %cst_16 = arith.constant 1.000000e+00 : f32
    %43 = vector.broadcast %cst_16 : f32 to vector<8x32xf32>
    %44 = arith.subf %42, %43 : vector<8x32xf32>
    %45 = vector.extract_strided_slice %37 {offsets = [0, 96], sizes = [8, 32], strides = [1, 1]} : vector<8x128xf32> to vector<8x32xf32>
    %46 = arith.mulf %39, %27 : vector<8x32xf32>
    %47 = arith.mulf %38, %44 : vector<8x32xf32>
    %48 = arith.addf %46, %47 : vector<8x32xf32>
    %49 = math.tanh %48 : vector<8x32xf32>
    %50 = arith.mulf %45, %49 : vector<8x32xf32>
    %51 = arith.truncf %50 : vector<8x32xf32> to vector<8x32xbf16>
    %cst_17 = arith.constant dense<0.000000e+00> : vector<8x128xf32>
    %52 = tpu.matmul %51, %6, %cst_17 {dimension_numbers = #tpu.dot_dimension_numbers<[1], [0], [0], [1], [0, 0, 1, 1], [], []>} : vector<8x32xbf16>, vector<32x128xbf16>, vector<8x128xf32> -> vector<8x128xf32>
    %53 = arith.addf %5, %52 : vector<8x128xf32>
    %54 = arith.negf %53 : vector<8x128xf32>
    %55 = math.exp %54 : vector<8x128xf32>
    %cst_18 = arith.constant 1.000000e+00 : f32
    %56 = vector.broadcast %cst_18 : f32 to vector<8x128xf32>
    %57 = arith.addf %56, %55 : vector<8x128xf32>
    %58 = arith.divf %56, %57 : vector<8x128xf32>
    %59 = vector.extract_strided_slice %58 {offsets = [0, 0], sizes = [8, 32], strides = [1, 1]} : vector<8x128xf32> to vector<8x32xf32>
    %60 = vector.extract_strided_slice %58 {offsets = [0, 32], sizes = [8, 32], strides = [1, 1]} : vector<8x128xf32> to vector<8x32xf32>
    %61 = vector.extract_strided_slice %58 {offsets = [0, 64], sizes = [8, 32], strides = [1, 1]} : vector<8x128xf32> to vector<8x32xf32>
    %cst_19 = arith.constant 2.000000e+00 : f32
    %62 = vector.broadcast %cst_19 : f32 to vector<8x32xf32>
    %63 = arith.mulf %62, %61 : vector<8x32xf32>
    %cst_20 = arith.constant 1.000000e+00 : f32
    %64 = vector.broadcast %cst_20 : f32 to vector<8x32xf32>
    %65 = arith.subf %63, %64 : vector<8x32xf32>
    %66 = vector.extract_strided_slice %58 {offsets = [0, 96], sizes = [8, 32], strides = [1, 1]} : vector<8x128xf32> to vector<8x32xf32>
    %67 = arith.mulf %60, %48 : vector<8x32xf32>
    %68 = arith.mulf %59, %65 : vector<8x32xf32>
    %69 = arith.addf %67, %68 : vector<8x32xf32>
    %70 = math.tanh %69 : vector<8x32xf32>
    %71 = arith.mulf %66, %70 : vector<8x32xf32>
    %72 = arith.truncf %71 : vector<8x32xf32> to vector<8x32xbf16>
    %cst_21 = arith.constant dense<0.000000e+00> : vector<8x128xf32>
    %73 = tpu.matmul %72, %6, %cst_21 {dimension_numbers = #tpu.dot_dimension_numbers<[1], [0], [0], [1], [0, 0, 1, 1], [], []>} : vector<8x32xbf16>, vector<32x128xbf16>, vector<8x128xf32> -> vector<8x128xf32>
    %74 = arith.addf %5, %73 : vector<8x128xf32>
    %75 = arith.negf %74 : vector<8x128xf32>
    %76 = math.exp %75 : vector<8x128xf32>
    %cst_22 = arith.constant 1.000000e+00 : f32
    %77 = vector.broadcast %cst_22 : f32 to vector<8x128xf32>
    %78 = arith.addf %77, %76 : vector<8x128xf32>
    %79 = arith.divf %77, %78 : vector<8x128xf32>
    %80 = vector.extract_strided_slice %79 {offsets = [0, 0], sizes = [8, 32], strides = [1, 1]} : vector<8x128xf32> to vector<8x32xf32>
    %81 = vector.extract_strided_slice %79 {offsets = [0, 32], sizes = [8, 32], strides = [1, 1]} : vector<8x128xf32> to vector<8x32xf32>
    %82 = vector.extract_strided_slice %79 {offsets = [0, 64], sizes = [8, 32], strides = [1, 1]} : vector<8x128xf32> to vector<8x32xf32>
    %cst_23 = arith.constant 2.000000e+00 : f32
    %83 = vector.broadcast %cst_23 : f32 to vector<8x32xf32>
    %84 = arith.mulf %83, %82 : vector<8x32xf32>
    %cst_24 = arith.constant 1.000000e+00 : f32
    %85 = vector.broadcast %cst_24 : f32 to vector<8x32xf32>
    %86 = arith.subf %84, %85 : vector<8x32xf32>
    %87 = vector.extract_strided_slice %79 {offsets = [0, 96], sizes = [8, 32], strides = [1, 1]} : vector<8x128xf32> to vector<8x32xf32>
    %88 = arith.mulf %81, %69 : vector<8x32xf32>
    %89 = arith.mulf %80, %86 : vector<8x32xf32>
    %90 = arith.addf %88, %89 : vector<8x32xf32>
    %91 = math.tanh %90 : vector<8x32xf32>
    %92 = arith.mulf %87, %91 : vector<8x32xf32>
    %93 = arith.truncf %92 : vector<8x32xf32> to vector<8x32xbf16>
    %cst_25 = arith.constant dense<0.000000e+00> : vector<8x128xf32>
    %94 = tpu.matmul %93, %6, %cst_25 {dimension_numbers = #tpu.dot_dimension_numbers<[1], [0], [0], [1], [0, 0, 1, 1], [], []>} : vector<8x32xbf16>, vector<32x128xbf16>, vector<8x128xf32> -> vector<8x128xf32>
    %95 = arith.addf %5, %94 : vector<8x128xf32>
    %96 = arith.negf %95 : vector<8x128xf32>
    %97 = math.exp %96 : vector<8x128xf32>
    %cst_26 = arith.constant 1.000000e+00 : f32
    %98 = vector.broadcast %cst_26 : f32 to vector<8x128xf32>
    %99 = arith.addf %98, %97 : vector<8x128xf32>
    %100 = arith.divf %98, %99 : vector<8x128xf32>
    %101 = vector.extract_strided_slice %100 {offsets = [0, 0], sizes = [8, 32], strides = [1, 1]} : vector<8x128xf32> to vector<8x32xf32>
    %102 = vector.extract_strided_slice %100 {offsets = [0, 32], sizes = [8, 32], strides = [1, 1]} : vector<8x128xf32> to vector<8x32xf32>
    %103 = vector.extract_strided_slice %100 {offsets = [0, 64], sizes = [8, 32], strides = [1, 1]} : vector<8x128xf32> to vector<8x32xf32>
    %cst_27 = arith.constant 2.000000e+00 : f32
    %104 = vector.broadcast %cst_27 : f32 to vector<8x32xf32>
    %105 = arith.mulf %104, %103 : vector<8x32xf32>
    %cst_28 = arith.constant 1.000000e+00 : f32
    %106 = vector.broadcast %cst_28 : f32 to vector<8x32xf32>
    %107 = arith.subf %105, %106 : vector<8x32xf32>
    %108 = vector.extract_strided_slice %100 {offsets = [0, 96], sizes = [8, 32], strides = [1, 1]} : vector<8x128xf32> to vector<8x32xf32>
    %109 = arith.mulf %102, %90 : vector<8x32xf32>
    %110 = arith.mulf %101, %107 : vector<8x32xf32>
    %111 = arith.addf %109, %110 : vector<8x32xf32>
    %112 = math.tanh %111 : vector<8x32xf32>
    %113 = arith.mulf %108, %112 : vector<8x32xf32>
    %114 = arith.truncf %113 : vector<8x32xf32> to vector<8x32xbf16>
    %cst_29 = arith.constant dense<0.000000e+00> : vector<8x128xf32>
    %115 = tpu.matmul %114, %6, %cst_29 {dimension_numbers = #tpu.dot_dimension_numbers<[1], [0], [0], [1], [0, 0, 1, 1], [], []>} : vector<8x32xbf16>, vector<32x128xbf16>, vector<8x128xf32> -> vector<8x128xf32>
    %116 = arith.addf %5, %115 : vector<8x128xf32>
    %117 = arith.negf %116 : vector<8x128xf32>
    %118 = math.exp %117 : vector<8x128xf32>
    %cst_30 = arith.constant 1.000000e+00 : f32
    %119 = vector.broadcast %cst_30 : f32 to vector<8x128xf32>
    %120 = arith.addf %119, %118 : vector<8x128xf32>
    %121 = arith.divf %119, %120 : vector<8x128xf32>
    %122 = vector.extract_strided_slice %121 {offsets = [0, 0], sizes = [8, 32], strides = [1, 1]} : vector<8x128xf32> to vector<8x32xf32>
    %123 = vector.extract_strided_slice %121 {offsets = [0, 32], sizes = [8, 32], strides = [1, 1]} : vector<8x128xf32> to vector<8x32xf32>
    %124 = vector.extract_strided_slice %121 {offsets = [0, 64], sizes = [8, 32], strides = [1, 1]} : vector<8x128xf32> to vector<8x32xf32>
    %cst_31 = arith.constant 2.000000e+00 : f32
    %125 = vector.broadcast %cst_31 : f32 to vector<8x32xf32>
    %126 = arith.mulf %125, %124 : vector<8x32xf32>
    %cst_32 = arith.constant 1.000000e+00 : f32
    %127 = vector.broadcast %cst_32 : f32 to vector<8x32xf32>
    %128 = arith.subf %126, %127 : vector<8x32xf32>
    %129 = vector.extract_strided_slice %121 {offsets = [0, 96], sizes = [8, 32], strides = [1, 1]} : vector<8x128xf32> to vector<8x32xf32>
    %130 = arith.mulf %123, %111 : vector<8x32xf32>
    %131 = arith.mulf %122, %128 : vector<8x32xf32>
    %132 = arith.addf %130, %131 : vector<8x32xf32>
    %133 = math.tanh %132 : vector<8x32xf32>
    %134 = arith.mulf %129, %133 : vector<8x32xf32>
    %135 = arith.truncf %134 : vector<8x32xf32> to vector<8x32xbf16>
    %cst_33 = arith.constant dense<0.000000e+00> : vector<8x128xf32>
    %136 = tpu.matmul %135, %6, %cst_33 {dimension_numbers = #tpu.dot_dimension_numbers<[1], [0], [0], [1], [0, 0, 1, 1], [], []>} : vector<8x32xbf16>, vector<32x128xbf16>, vector<8x128xf32> -> vector<8x128xf32>
    %137 = arith.addf %5, %136 : vector<8x128xf32>
    %138 = arith.negf %137 : vector<8x128xf32>
    %139 = math.exp %138 : vector<8x128xf32>
    %cst_34 = arith.constant 1.000000e+00 : f32
    %140 = vector.broadcast %cst_34 : f32 to vector<8x128xf32>
    %141 = arith.addf %140, %139 : vector<8x128xf32>
    %142 = arith.divf %140, %141 : vector<8x128xf32>
    %143 = vector.extract_strided_slice %142 {offsets = [0, 0], sizes = [8, 32], strides = [1, 1]} : vector<8x128xf32> to vector<8x32xf32>
    %144 = vector.extract_strided_slice %142 {offsets = [0, 32], sizes = [8, 32], strides = [1, 1]} : vector<8x128xf32> to vector<8x32xf32>
    %145 = vector.extract_strided_slice %142 {offsets = [0, 64], sizes = [8, 32], strides = [1, 1]} : vector<8x128xf32> to vector<8x32xf32>
    %cst_35 = arith.constant 2.000000e+00 : f32
    %146 = vector.broadcast %cst_35 : f32 to vector<8x32xf32>
    %147 = arith.mulf %146, %145 : vector<8x32xf32>
    %cst_36 = arith.constant 1.000000e+00 : f32
    %148 = vector.broadcast %cst_36 : f32 to vector<8x32xf32>
    %149 = arith.subf %147, %148 : vector<8x32xf32>
    %150 = vector.extract_strided_slice %142 {offsets = [0, 96], sizes = [8, 32], strides = [1, 1]} : vector<8x128xf32> to vector<8x32xf32>
    %151 = arith.mulf %144, %132 : vector<8x32xf32>
    %152 = arith.mulf %143, %149 : vector<8x32xf32>
    %153 = arith.addf %151, %152 : vector<8x32xf32>
    %154 = math.tanh %153 : vector<8x32xf32>
    %155 = arith.mulf %150, %154 : vector<8x32xf32>
    %156 = arith.truncf %155 : vector<8x32xf32> to vector<8x32xbf16>
    %cst_37 = arith.constant dense<0.000000e+00> : vector<8x128xf32>
    %157 = tpu.matmul %156, %6, %cst_37 {dimension_numbers = #tpu.dot_dimension_numbers<[1], [0], [0], [1], [0, 0, 1, 1], [], []>} : vector<8x32xbf16>, vector<32x128xbf16>, vector<8x128xf32> -> vector<8x128xf32>
    %158 = arith.addf %5, %157 : vector<8x128xf32>
    %159 = arith.negf %158 : vector<8x128xf32>
    %160 = math.exp %159 : vector<8x128xf32>
    %cst_38 = arith.constant 1.000000e+00 : f32
    %161 = vector.broadcast %cst_38 : f32 to vector<8x128xf32>
    %162 = arith.addf %161, %160 : vector<8x128xf32>
    %163 = arith.divf %161, %162 : vector<8x128xf32>
    %164 = vector.extract_strided_slice %163 {offsets = [0, 0], sizes = [8, 32], strides = [1, 1]} : vector<8x128xf32> to vector<8x32xf32>
    %165 = vector.extract_strided_slice %163 {offsets = [0, 32], sizes = [8, 32], strides = [1, 1]} : vector<8x128xf32> to vector<8x32xf32>
    %166 = vector.extract_strided_slice %163 {offsets = [0, 64], sizes = [8, 32], strides = [1, 1]} : vector<8x128xf32> to vector<8x32xf32>
    %cst_39 = arith.constant 2.000000e+00 : f32
    %167 = vector.broadcast %cst_39 : f32 to vector<8x32xf32>
    %168 = arith.mulf %167, %166 : vector<8x32xf32>
    %cst_40 = arith.constant 1.000000e+00 : f32
    %169 = vector.broadcast %cst_40 : f32 to vector<8x32xf32>
    %170 = arith.subf %168, %169 : vector<8x32xf32>
    %171 = vector.extract_strided_slice %163 {offsets = [0, 96], sizes = [8, 32], strides = [1, 1]} : vector<8x128xf32> to vector<8x32xf32>
    %172 = arith.mulf %165, %153 : vector<8x32xf32>
    %173 = arith.mulf %164, %170 : vector<8x32xf32>
    %174 = arith.addf %172, %173 : vector<8x32xf32>
    %175 = math.tanh %174 : vector<8x32xf32>
    %176 = arith.mulf %171, %175 : vector<8x32xf32>
    %177 = arith.truncf %176 : vector<8x32xf32> to vector<8x32xbf16>
    %cst_41 = arith.constant dense<0.000000e+00> : vector<8x128xf32>
    %178 = tpu.matmul %177, %6, %cst_41 {dimension_numbers = #tpu.dot_dimension_numbers<[1], [0], [0], [1], [0, 0, 1, 1], [], []>} : vector<8x32xbf16>, vector<32x128xbf16>, vector<8x128xf32> -> vector<8x128xf32>
    %179 = arith.addf %5, %178 : vector<8x128xf32>
    %180 = arith.negf %179 : vector<8x128xf32>
    %181 = math.exp %180 : vector<8x128xf32>
    %cst_42 = arith.constant 1.000000e+00 : f32
    %182 = vector.broadcast %cst_42 : f32 to vector<8x128xf32>
    %183 = arith.addf %182, %181 : vector<8x128xf32>
    %184 = arith.divf %182, %183 : vector<8x128xf32>
    %185 = vector.extract_strided_slice %184 {offsets = [0, 0], sizes = [8, 32], strides = [1, 1]} : vector<8x128xf32> to vector<8x32xf32>
    %186 = vector.extract_strided_slice %184 {offsets = [0, 32], sizes = [8, 32], strides = [1, 1]} : vector<8x128xf32> to vector<8x32xf32>
    %187 = vector.extract_strided_slice %184 {offsets = [0, 64], sizes = [8, 32], strides = [1, 1]} : vector<8x128xf32> to vector<8x32xf32>
    %cst_43 = arith.constant 2.000000e+00 : f32
    %188 = vector.broadcast %cst_43 : f32 to vector<8x32xf32>
    %189 = arith.mulf %188, %187 : vector<8x32xf32>
    %cst_44 = arith.constant 1.000000e+00 : f32
    %190 = vector.broadcast %cst_44 : f32 to vector<8x32xf32>
    %191 = arith.subf %189, %190 : vector<8x32xf32>
    %192 = vector.extract_strided_slice %184 {offsets = [0, 96], sizes = [8, 32], strides = [1, 1]} : vector<8x128xf32> to vector<8x32xf32>
    %193 = arith.mulf %186, %174 : vector<8x32xf32>
    %194 = arith.mulf %185, %191 : vector<8x32xf32>
    %195 = arith.addf %193, %194 : vector<8x32xf32>
    %196 = math.tanh %195 : vector<8x32xf32>
    %197 = arith.mulf %192, %196 : vector<8x32xf32>
    %198 = arith.truncf %197 : vector<8x32xf32> to vector<8x32xbf16>
    %cst_45 = arith.constant dense<0.000000e+00> : vector<8x128xf32>
    %199 = tpu.matmul %198, %6, %cst_45 {dimension_numbers = #tpu.dot_dimension_numbers<[1], [0], [0], [1], [0, 0, 1, 1], [], []>} : vector<8x32xbf16>, vector<32x128xbf16>, vector<8x128xf32> -> vector<8x128xf32>
    %200 = arith.addf %5, %199 : vector<8x128xf32>
    %201 = arith.negf %200 : vector<8x128xf32>
    %202 = math.exp %201 : vector<8x128xf32>
    %cst_46 = arith.constant 1.000000e+00 : f32
    %203 = vector.broadcast %cst_46 : f32 to vector<8x128xf32>
    %204 = arith.addf %203, %202 : vector<8x128xf32>
    %205 = arith.divf %203, %204 : vector<8x128xf32>
    %206 = vector.extract_strided_slice %205 {offsets = [0, 0], sizes = [8, 32], strides = [1, 1]} : vector<8x128xf32> to vector<8x32xf32>
    %207 = vector.extract_strided_slice %205 {offsets = [0, 32], sizes = [8, 32], strides = [1, 1]} : vector<8x128xf32> to vector<8x32xf32>
    %208 = vector.extract_strided_slice %205 {offsets = [0, 64], sizes = [8, 32], strides = [1, 1]} : vector<8x128xf32> to vector<8x32xf32>
    %cst_47 = arith.constant 2.000000e+00 : f32
    %209 = vector.broadcast %cst_47 : f32 to vector<8x32xf32>
    %210 = arith.mulf %209, %208 : vector<8x32xf32>
    %cst_48 = arith.constant 1.000000e+00 : f32
    %211 = vector.broadcast %cst_48 : f32 to vector<8x32xf32>
    %212 = arith.subf %210, %211 : vector<8x32xf32>
    %213 = vector.extract_strided_slice %205 {offsets = [0, 96], sizes = [8, 32], strides = [1, 1]} : vector<8x128xf32> to vector<8x32xf32>
    %214 = arith.mulf %207, %195 : vector<8x32xf32>
    %215 = arith.mulf %206, %212 : vector<8x32xf32>
    %216 = arith.addf %214, %215 : vector<8x32xf32>
    %217 = math.tanh %216 : vector<8x32xf32>
    %218 = arith.mulf %213, %217 : vector<8x32xf32>
    %219 = arith.truncf %218 : vector<8x32xf32> to vector<8x32xbf16>
    %cst_49 = arith.constant dense<0.000000e+00> : vector<8x128xf32>
    %220 = tpu.matmul %219, %6, %cst_49 {dimension_numbers = #tpu.dot_dimension_numbers<[1], [0], [0], [1], [0, 0, 1, 1], [], []>} : vector<8x32xbf16>, vector<32x128xbf16>, vector<8x128xf32> -> vector<8x128xf32>
    %221 = arith.addf %5, %220 : vector<8x128xf32>
    %222 = arith.negf %221 : vector<8x128xf32>
    %223 = math.exp %222 : vector<8x128xf32>
    %cst_50 = arith.constant 1.000000e+00 : f32
    %224 = vector.broadcast %cst_50 : f32 to vector<8x128xf32>
    %225 = arith.addf %224, %223 : vector<8x128xf32>
    %226 = arith.divf %224, %225 : vector<8x128xf32>
    %227 = vector.extract_strided_slice %226 {offsets = [0, 0], sizes = [8, 32], strides = [1, 1]} : vector<8x128xf32> to vector<8x32xf32>
    %228 = vector.extract_strided_slice %226 {offsets = [0, 32], sizes = [8, 32], strides = [1, 1]} : vector<8x128xf32> to vector<8x32xf32>
    %229 = vector.extract_strided_slice %226 {offsets = [0, 64], sizes = [8, 32], strides = [1, 1]} : vector<8x128xf32> to vector<8x32xf32>
    %cst_51 = arith.constant 2.000000e+00 : f32
    %230 = vector.broadcast %cst_51 : f32 to vector<8x32xf32>
    %231 = arith.mulf %230, %229 : vector<8x32xf32>
    %cst_52 = arith.constant 1.000000e+00 : f32
    %232 = vector.broadcast %cst_52 : f32 to vector<8x32xf32>
    %233 = arith.subf %231, %232 : vector<8x32xf32>
    %234 = vector.extract_strided_slice %226 {offsets = [0, 96], sizes = [8, 32], strides = [1, 1]} : vector<8x128xf32> to vector<8x32xf32>
    %235 = arith.mulf %228, %216 : vector<8x32xf32>
    %236 = arith.mulf %227, %233 : vector<8x32xf32>
    %237 = arith.addf %235, %236 : vector<8x32xf32>
    %238 = math.tanh %237 : vector<8x32xf32>
    %239 = arith.mulf %234, %238 : vector<8x32xf32>
    %240 = arith.truncf %239 : vector<8x32xf32> to vector<8x32xbf16>
    %cst_53 = arith.constant dense<0.000000e+00> : vector<8x128xf32>
    %241 = tpu.matmul %240, %6, %cst_53 {dimension_numbers = #tpu.dot_dimension_numbers<[1], [0], [0], [1], [0, 0, 1, 1], [], []>} : vector<8x32xbf16>, vector<32x128xbf16>, vector<8x128xf32> -> vector<8x128xf32>
    %242 = arith.addf %5, %241 : vector<8x128xf32>
    %243 = arith.negf %242 : vector<8x128xf32>
    %244 = math.exp %243 : vector<8x128xf32>
    %cst_54 = arith.constant 1.000000e+00 : f32
    %245 = vector.broadcast %cst_54 : f32 to vector<8x128xf32>
    %246 = arith.addf %245, %244 : vector<8x128xf32>
    %247 = arith.divf %245, %246 : vector<8x128xf32>
    %248 = vector.extract_strided_slice %247 {offsets = [0, 0], sizes = [8, 32], strides = [1, 1]} : vector<8x128xf32> to vector<8x32xf32>
    %249 = vector.extract_strided_slice %247 {offsets = [0, 32], sizes = [8, 32], strides = [1, 1]} : vector<8x128xf32> to vector<8x32xf32>
    %250 = vector.extract_strided_slice %247 {offsets = [0, 64], sizes = [8, 32], strides = [1, 1]} : vector<8x128xf32> to vector<8x32xf32>
    %cst_55 = arith.constant 2.000000e+00 : f32
    %251 = vector.broadcast %cst_55 : f32 to vector<8x32xf32>
    %252 = arith.mulf %251, %250 : vector<8x32xf32>
    %cst_56 = arith.constant 1.000000e+00 : f32
    %253 = vector.broadcast %cst_56 : f32 to vector<8x32xf32>
    %254 = arith.subf %252, %253 : vector<8x32xf32>
    %255 = vector.extract_strided_slice %247 {offsets = [0, 96], sizes = [8, 32], strides = [1, 1]} : vector<8x128xf32> to vector<8x32xf32>
    %256 = arith.mulf %249, %237 : vector<8x32xf32>
    %257 = arith.mulf %248, %254 : vector<8x32xf32>
    %258 = arith.addf %256, %257 : vector<8x32xf32>
    %259 = math.tanh %258 : vector<8x32xf32>
    %260 = arith.mulf %255, %259 : vector<8x32xf32>
    %261 = arith.truncf %260 : vector<8x32xf32> to vector<8x32xbf16>
    %cst_57 = arith.constant dense<0.000000e+00> : vector<8x128xf32>
    %262 = tpu.matmul %261, %6, %cst_57 {dimension_numbers = #tpu.dot_dimension_numbers<[1], [0], [0], [1], [0, 0, 1, 1], [], []>} : vector<8x32xbf16>, vector<32x128xbf16>, vector<8x128xf32> -> vector<8x128xf32>
    %263 = arith.addf %5, %262 : vector<8x128xf32>
    %264 = arith.negf %263 : vector<8x128xf32>
    %265 = math.exp %264 : vector<8x128xf32>
    %cst_58 = arith.constant 1.000000e+00 : f32
    %266 = vector.broadcast %cst_58 : f32 to vector<8x128xf32>
    %267 = arith.addf %266, %265 : vector<8x128xf32>
    %268 = arith.divf %266, %267 : vector<8x128xf32>
    %269 = vector.extract_strided_slice %268 {offsets = [0, 0], sizes = [8, 32], strides = [1, 1]} : vector<8x128xf32> to vector<8x32xf32>
    %270 = vector.extract_strided_slice %268 {offsets = [0, 32], sizes = [8, 32], strides = [1, 1]} : vector<8x128xf32> to vector<8x32xf32>
    %271 = vector.extract_strided_slice %268 {offsets = [0, 64], sizes = [8, 32], strides = [1, 1]} : vector<8x128xf32> to vector<8x32xf32>
    %cst_59 = arith.constant 2.000000e+00 : f32
    %272 = vector.broadcast %cst_59 : f32 to vector<8x32xf32>
    %273 = arith.mulf %272, %271 : vector<8x32xf32>
    %cst_60 = arith.constant 1.000000e+00 : f32
    %274 = vector.broadcast %cst_60 : f32 to vector<8x32xf32>
    %275 = arith.subf %273, %274 : vector<8x32xf32>
    %276 = vector.extract_strided_slice %268 {offsets = [0, 96], sizes = [8, 32], strides = [1, 1]} : vector<8x128xf32> to vector<8x32xf32>
    %277 = arith.mulf %270, %258 : vector<8x32xf32>
    %278 = arith.mulf %269, %275 : vector<8x32xf32>
    %279 = arith.addf %277, %278 : vector<8x32xf32>
    %280 = math.tanh %279 : vector<8x32xf32>
    %281 = arith.mulf %276, %280 : vector<8x32xf32>
    %282 = arith.truncf %281 : vector<8x32xf32> to vector<8x32xbf16>
    %cst_61 = arith.constant dense<0.000000e+00> : vector<8x128xf32>
    %283 = tpu.matmul %282, %6, %cst_61 {dimension_numbers = #tpu.dot_dimension_numbers<[1], [0], [0], [1], [0, 0, 1, 1], [], []>} : vector<8x32xbf16>, vector<32x128xbf16>, vector<8x128xf32> -> vector<8x128xf32>
    %284 = arith.addf %5, %283 : vector<8x128xf32>
    %285 = arith.negf %284 : vector<8x128xf32>
    %286 = math.exp %285 : vector<8x128xf32>
    %cst_62 = arith.constant 1.000000e+00 : f32
    %287 = vector.broadcast %cst_62 : f32 to vector<8x128xf32>
    %288 = arith.addf %287, %286 : vector<8x128xf32>
    %289 = arith.divf %287, %288 : vector<8x128xf32>
    %290 = vector.extract_strided_slice %289 {offsets = [0, 0], sizes = [8, 32], strides = [1, 1]} : vector<8x128xf32> to vector<8x32xf32>
    %291 = vector.extract_strided_slice %289 {offsets = [0, 32], sizes = [8, 32], strides = [1, 1]} : vector<8x128xf32> to vector<8x32xf32>
    %292 = vector.extract_strided_slice %289 {offsets = [0, 64], sizes = [8, 32], strides = [1, 1]} : vector<8x128xf32> to vector<8x32xf32>
    %cst_63 = arith.constant 2.000000e+00 : f32
    %293 = vector.broadcast %cst_63 : f32 to vector<8x32xf32>
    %294 = arith.mulf %293, %292 : vector<8x32xf32>
    %cst_64 = arith.constant 1.000000e+00 : f32
    %295 = vector.broadcast %cst_64 : f32 to vector<8x32xf32>
    %296 = arith.subf %294, %295 : vector<8x32xf32>
    %297 = vector.extract_strided_slice %289 {offsets = [0, 96], sizes = [8, 32], strides = [1, 1]} : vector<8x128xf32> to vector<8x32xf32>
    %298 = arith.mulf %291, %279 : vector<8x32xf32>
    %299 = arith.mulf %290, %296 : vector<8x32xf32>
    %300 = arith.addf %298, %299 : vector<8x32xf32>
    %301 = math.tanh %300 : vector<8x32xf32>
    %302 = arith.mulf %297, %301 : vector<8x32xf32>
    %303 = arith.truncf %302 : vector<8x32xf32> to vector<8x32xbf16>
    %cst_65 = arith.constant dense<0.000000e+00> : vector<8x128xf32>
    %304 = tpu.matmul %303, %6, %cst_65 {dimension_numbers = #tpu.dot_dimension_numbers<[1], [0], [0], [1], [0, 0, 1, 1], [], []>} : vector<8x32xbf16>, vector<32x128xbf16>, vector<8x128xf32> -> vector<8x128xf32>
    %305 = arith.addf %5, %304 : vector<8x128xf32>
    %306 = arith.negf %305 : vector<8x128xf32>
    %307 = math.exp %306 : vector<8x128xf32>
    %cst_66 = arith.constant 1.000000e+00 : f32
    %308 = vector.broadcast %cst_66 : f32 to vector<8x128xf32>
    %309 = arith.addf %308, %307 : vector<8x128xf32>
    %310 = arith.divf %308, %309 : vector<8x128xf32>
    %311 = vector.extract_strided_slice %310 {offsets = [0, 0], sizes = [8, 32], strides = [1, 1]} : vector<8x128xf32> to vector<8x32xf32>
    %312 = vector.extract_strided_slice %310 {offsets = [0, 32], sizes = [8, 32], strides = [1, 1]} : vector<8x128xf32> to vector<8x32xf32>
    %313 = vector.extract_strided_slice %310 {offsets = [0, 64], sizes = [8, 32], strides = [1, 1]} : vector<8x128xf32> to vector<8x32xf32>
    %cst_67 = arith.constant 2.000000e+00 : f32
    %314 = vector.broadcast %cst_67 : f32 to vector<8x32xf32>
    %315 = arith.mulf %314, %313 : vector<8x32xf32>
    %cst_68 = arith.constant 1.000000e+00 : f32
    %316 = vector.broadcast %cst_68 : f32 to vector<8x32xf32>
    %317 = arith.subf %315, %316 : vector<8x32xf32>
    %318 = vector.extract_strided_slice %310 {offsets = [0, 96], sizes = [8, 32], strides = [1, 1]} : vector<8x128xf32> to vector<8x32xf32>
    %319 = arith.mulf %312, %300 : vector<8x32xf32>
    %320 = arith.mulf %311, %317 : vector<8x32xf32>
    %321 = arith.addf %319, %320 : vector<8x32xf32>
    %322 = math.tanh %321 : vector<8x32xf32>
    %323 = arith.mulf %318, %322 : vector<8x32xf32>
    %cst_69 = arith.constant 0.000000e+00 : f32
    %324 = vector.broadcast %cst_69 : f32 to vector<8x32xf32>
    %325 = tpu.concatenate %29, %50, %71, %92, %113, %134, %155, %176, %197, %218, %239, %260, %281, %302, %323, %324 in 1 : vector<8x32xf32>, vector<8x32xf32>, vector<8x32xf32>, vector<8x32xf32>, vector<8x32xf32>, vector<8x32xf32>, vector<8x32xf32>, vector<8x32xf32>, vector<8x32xf32>, vector<8x32xf32>, vector<8x32xf32>, vector<8x32xf32>, vector<8x32xf32>, vector<8x32xf32>, vector<8x32xf32>, vector<8x32xf32> -> vector<8x512xf32>
    %c0_70 = arith.constant 0 : index
    %c0_71 = arith.constant 0 : index
    %326 = vector.load %arg5[%c0_70, %c0_71] : memref<8x512xf32, #tpu.memory_space<vmem>>, vector<8x512xf32>
    tpu.vector_store %arg5[%c0_70, %c0_71], %325 {strides = array<i32>} : memref<8x512xf32, #tpu.memory_space<vmem>>, vector<8x512xf32>,
    return
  }
  func.func @transform_0(%arg0: i32) -> (i32, i32) {
    %c0_i32 = arith.constant 0 : i32
    %c0_i32_0 = arith.constant 0 : i32
    %c0_i32_1 = arith.constant 0 : i32
    return %c0_i32, %c0_i32_0 : i32, i32
  }
  func.func @transform_1(%arg0: i32) -> (i32, i32) {
    %c0_i32 = arith.constant 0 : i32
    %c0_i32_0 = arith.constant 0 : i32
    %c0_i32_1 = arith.constant 0 : i32
    return %c0_i32, %c0_i32_0 : i32, i32
  }
  func.func @transform_2(%arg0: i32) -> (i32, i32) {
    %c0_i32 = arith.constant 0 : i32
    %c0_i32_0 = arith.constant 0 : i32
    %c0_i32_1 = arith.constant 0 : i32
    return %c0_i32, %c0_i32_0 : i32, i32
  }
  func.func @transform_3(%arg0: i32) -> (i32, i32) {
    %c0_i32 = arith.constant 0 : i32
    %c0_i32_0 = arith.constant 0 : i32
    %c0_i32_1 = arith.constant 0 : i32
    return %c0_i32, %c0_i32_0 : i32, i32
  }
  func.func @transform_4(%arg0: i32) -> (i32, i32) {
    %c0_i32 = arith.constant 0 : i32
    %c0_i32_0 = arith.constant 0 : i32
    %c0_i32_1 = arith.constant 0 : i32
    return %c0_i32, %c0_i32_0 : i32, i32
  }
}

</mosaic_0001>

<llo_original>
// kernel: tpu_custom_call.1
$region0: #{tpu_custom_call.1}
  #allocation0 [shape = 'u32[]', space=smem, size = 0x4, offset = 0x4, fixed_abs, tag = 'smem constant byte address 0x4 - core index']
  #allocation1 [shape = 'u32[144,128]{1,0:T(1,128)}', space=vmem, size = 0x12000, scoped, tag = 'internal scratch']
  %s0 = inlined_call_operand.hbm [shape: f32[8,16], index: 0, kind: input, shape index: {}]
  %s1 = inlined_call_operand.hbm [shape: f32[16,128], index: 1, kind: input, shape index: {}]
  %s2 = inlined_call_operand.hbm [shape: bf16[32,128], index: 2, kind: input, shape index: {}]
  %s3 = inlined_call_operand.vmem [shape: f32[1,128], index: 3, kind: input, shape index: {}]
  %s4 = inlined_call_operand.hbm [shape: f32[8,512], index: 4, kind: output, shape index: {}]
  %s5 = sld [smem:[#allocation0]]
  $region38: #{tpu_custom_call.1} parent=0
    _
  %s7 = ssub.s32 1, %s5
  %s8 = scalar_select 0, %s7, %s5
  $region1: #{tpu_custom_call.1} parent=0
    #allocation2 [shape = 'u8[4096]{0}', space=vmem, size = 0x1000, scoped, tag = 'input window, operand 0, single buffered']
    #allocation3 [shape = 's32[1]{0}', space=sflag, size = 0x4, scoped, tag = 'scoped memory for tpu_custom_call.1']
    #allocation4 [shape = 's32[1]{0}', space=sflag, size = 0x4, scoped, tag = 'scoped memory for tpu_custom_call.1']
    #allocation5 [shape = 'u8[8192]{0}', space=vmem, size = 0x2000, scoped, tag = 'input window, operand 1, single buffered']
    #allocation6 [shape = 's32[1]{0}', space=sflag, size = 0x4, scoped, tag = 'scoped memory for tpu_custom_call.1']
    #allocation7 [shape = 'u8[8192]{0}', space=vmem, size = 0x2000, scoped, tag = 'input window, operand 2, single buffered']
    #allocation8 [shape = 'u8[16384]{0}', space=vmem, size = 0x4000, scoped, tag = 'output window, operand 0, single buffered']
    %9 = vsyncpa [#allocation3], 0
    %10 = vsyncpa [#allocation6], 0
    %11 = vsyncpa [#allocation4], 0
    // Predicated region
    $region2: #{tpu_custom_call.1} parent=1 // pred_check
      _
    $region3: #{tpu_custom_call.1} parent=1 // pred_check_branch
      %13 = sbr.rel (0) target = $region5
    $region4: #{tpu_custom_call.1} parent=1 // pred_region
      %s15 = ssub.s32 128, 128
      %16 = vsyncadd [#allocation3], %s15
      %s18 = sshll.u32 [#allocation2], 4
      %s19 = int_to_ptr.vmem [resolvable:$true] %s18
      %21 = dma.hbm_to_vmem [thread:$0]  %s0, 128, %s19, [#allocation3]
    $region5: #{tpu_custom_call.1} parent=1 // pred_fallthru
      _
    // Predicated region
    $region6: #{tpu_custom_call.1} parent=1 // pred_check
      _
    $region7: #{tpu_custom_call.1} parent=1 // pred_check_branch
      %23 = sbr.rel (0) target = $region9
    $region8: #{tpu_custom_call.1} parent=1 // pred_region
      %s25 = ssub.s32 256, 256
      %26 = vsyncadd [#allocation6], %s25
      %s27 = sshll.u32 [#allocation5], 4
      %s28 = int_to_ptr.vmem [resolvable:$true] %s27
      %33 = dma.hbm_to_vmem [thread:$0]  %s1, 256, %s28, [#allocation6], 128, 128, 8
    $region9: #{tpu_custom_call.1} parent=1 // pred_fallthru
      _
    // Predicated region
    $region10: #{tpu_custom_call.1} parent=1 // pred_check
      _
    $region11: #{tpu_custom_call.1} parent=1 // pred_check_branch
      %35 = sbr.rel (0) target = $region13
    $region12: #{tpu_custom_call.1} parent=1 // pred_region
      %s37 = ssub.s32 256, 256
      %38 = vsyncadd [#allocation6], %s37
      %s39 = sshll.u32 [#allocation7], 4
      %s40 = int_to_ptr.vmem [resolvable:$true] %s39
      %45 = dma.hbm_to_vmem [thread:$0]  %s2, 256, %s40, [#allocation6], 64, 64, 4
    $region13: #{tpu_custom_call.1} parent=1 // pred_fallthru
      _
    // Predicated region
    $region14: #{tpu_custom_call.1} parent=1 // pred_check
      _
    $region15: #{tpu_custom_call.1} parent=1 // pred_check_branch
      %47 = sbr.rel (0) target = $region17
    $region16: #{tpu_custom_call.1} parent=1 // pred_region
      _
    $region17: #{tpu_custom_call.1} parent=1 // pred_fallthru
      _
    // Predicated region
    $region18: #{tpu_custom_call.1} parent=1 // pred_check
      _
    $region19: #{tpu_custom_call.1} parent=1 // pred_check_branch
      %49 = sbr.rel (0) target = $region21
    $region20: #{tpu_custom_call.1} parent=1 // pred_region
      %50 = dma.done [#allocation3], 128
    $region21: #{tpu_custom_call.1} parent=1 // pred_fallthru
      _
    // Predicated region
    $region22: #{tpu_custom_call.1} parent=1 // pred_check
      _
    $region23: #{tpu_custom_call.1} parent=1 // pred_check_branch
      %52 = sbr.rel (0) target = $region25
    $region24: #{tpu_custom_call.1} parent=1 // pred_region
      %53 = dma.done [#allocation6], 256
    $region25: #{tpu_custom_call.1} parent=1 // pred_fallthru
      _
    // Predicated region
    $region26: #{tpu_custom_call.1} parent=1 // pred_check
      _
    $region27: #{tpu_custom_call.1} parent=1 // pred_check_branch
      %55 = sbr.rel (0) target = $region29
    $region28: #{tpu_custom_call.1} parent=1 // pred_region
      %56 = dma.done [#allocation6], 256
    $region29: #{tpu_custom_call.1} parent=1 // pred_fallthru
      _
    %v58 = vld [vmem:[#allocation2] sm:$0xff]
    %v59 = vld [vmem:[#allocation5] sm:$0xff]
    %v60 = vld [vmem:[#allocation5 + $0x8] sm:$0xff]
    %v61 = vld [vmem:[%s3] sm:$0x1]
    %v63 = vlaneseq
    %v64 = vshrl.u32 %v63, 7
    %v65 = vsub.s32 0, %v64
    %v66 = vrot.slane %v61, %v65
    %vm68 = vcmask 130048
    %v70 = vsel %vm68, %v58, 0
    %72 = vmatprep.subr.mxu0 0.0
    %73 = vmatpush1.msra.mxu0 %v59
    %74 = vmatprep.subr.mxu0 0.0
    %75 = vmatpush1.msra.mxu0 %v60
    %76 = vmatprep.subr.mxu0 0.0
    %77 = vmatpush1.msra.mxu0 0.0
    %78 = vmatprep.subr.mxu0 0.0
    %79 = vmatpush1.msra.mxu0 0.0
    %80 = vmatprep.subr.mxu0 0.0
    %81 = vmatpush1.msra.mxu0 0.0
    %82 = vmatprep.subr.mxu0 0.0
    %83 = vmatpush1.msra.mxu0 0.0
    %84 = vmatprep.subr.mxu0 0.0
    %85 = vmatpush1.msra.mxu0 0.0
    %86 = vmatprep.subr.mxu0 0.0
    %87 = vmatpush1.msra.mxu0 0.0
    %88 = vmatprep.subr.mxu0 0.0
    %89 = vmatpush1.msra.mxu0 0.0
    %90 = vmatprep.subr.mxu0 0.0
    %91 = vmatpush1.msra.mxu0 0.0
    %92 = vmatprep.subr.mxu0 0.0
    %93 = vmatpush1.msra.mxu0 0.0
    %94 = vmatprep.subr.mxu0 0.0
    %95 = vmatpush1.msra.mxu0 0.0
    %96 = vmatprep.subr.mxu0 0.0
    %97 = vmatpush1.msra.mxu0 0.0
    %98 = vmatprep.subr.mxu0 0.0
    %99 = vmatpush1.msra.mxu0 0.0
    %100 = vmatprep.subr.mxu0 0.0
    %101 = vmatpush1.msra.mxu0 0.0
    %102 = vmatprep.subr.mxu0 0.0
    %103 = vmatpush1.msra.mxu0 0.0
    %104 = vmatprep.subr.mxu0 0.0
    %105 = vmatpush1.msra.mxu0 0.0
    %106 = vmatprep.subr.mxu0 0.0
    %107 = vmatpush1.msra.mxu0 0.0
    %108 = vmatprep.subr.mxu0 0.0
    %109 = vmatpush1.msra.mxu0 0.0
    %110 = vmatprep.subr.mxu0 0.0
    %111 = vmatpush1.msra.mxu0 0.0
    %112 = vmatprep.subr.mxu0 0.0
    %113 = vmatpush1.msra.mxu0 0.0
    %114 = vmatprep.subr.mxu0 0.0
    %115 = vmatpush1.msra.mxu0 0.0
    %116 = vmatprep.subr.mxu0 0.0
    %117 = vmatpush1.msra.mxu0 0.0
    %118 = vmatprep.subr.mxu0 0.0
    %119 = vmatpush1.msra.mxu0 0.0
    %120 = vmatprep.subr.mxu0 0.0
    %121 = vmatpush1.msra.mxu0 0.0
    %122 = vmatprep.subr.mxu0 0.0
    %123 = vmatpush1.msra.mxu0 0.0
    %124 = vmatprep.subr.mxu0 0.0
    %125 = vmatpush1.msra.mxu0 0.0
    %126 = vmatprep.subr.mxu0 0.0
    %127 = vmatpush1.msra.mxu0 0.0
    %128 = vmatprep.subr.mxu0 0.0
    %129 = vmatpush1.msra.mxu0 0.0
    %130 = vmatprep.subr.mxu0 0.0
    %131 = vmatpush1.msra.mxu0 0.0
    %132 = vmatprep.subr.mxu0 0.0
    %133 = vmatpush1.msra.mxu0 0.0
    %134 = vmatprep.subr.mxu0 0.0
    %135 = vmatpush1.msra.mxu0 0.0
    %136 = vmatprep.mubr.f32.mxu0 0.0
    %137 = vmatmul.mubr.f32.gmra.mrb[0].mxu0 %v70
    %v138 = vpop.f32.mrb[0].mxu0
    %v139 = vadd.f32 %v66, %v138
    %v140 = vpop.f32.mrb[0].mxu0
    %141 = vdwg.mxu0
    %v142 = vld [vmem:[#allocation7] sm:$0xf]
    %v143 = vld [vmem:[#allocation7 + $0x4] sm:$0xf]
    %v144 = vld [vmem:[#allocation7 + $0x8] sm:$0xf]
    %v145 = vld [vmem:[#allocation7 + $0xc] sm:$0xf]
    %v146 = vpack.c.bf16 0.01, 0.01
    %v151 = vunpack.c.l.b16 %v142
    %v152 = vunpack.c.l.b16 %v143
    %v153 = vunpack.c.l.b16 %v144
    %v154 = vunpack.c.l.b16 %v145
    %v155 = vpack.c.b16 %v152, %v151
    %v156 = vpack.c.b16 %v154, %v153
    %vm159 = vcmask 261120
    %v161 = vsel %vm159, %v146, 0
    %163 = vmatprep.subr.bf16.mxu0 0
    %164 = vmatpush1.bf16.msra.mxu0 %v155
    %165 = vmatprep.subr.bf16.mxu0 0
    %166 = vmatpush1.bf16.msra.mxu0 %v156
    %167 = vmatprep.subr.bf16.mxu0 0
    %168 = vmatpush1.bf16.msra.mxu0 0
    %169 = vmatprep.subr.bf16.mxu0 0
    %170 = vmatpush1.bf16.msra.mxu0 0
    %171 = vmatprep.subr.bf16.mxu0 0
    %172 = vmatpush1.bf16.msra.mxu0 0
    %173 = vmatprep.subr.bf16.mxu0 0
    %174 = vmatpush1.bf16.msra.mxu0 0
    %175 = vmatprep.subr.bf16.mxu0 0
    %176 = vmatpush1.bf16.msra.mxu0 0
    %177 = vmatprep.subr.bf16.mxu0 0
    %178 = vmatpush1.bf16.msra.mxu0 0
    %179 = vmatprep.subr.bf16.mxu0 0
    %180 = vmatpush1.bf16.msra.mxu0 0
    %181 = vmatprep.subr.bf16.mxu0 0
    %182 = vmatpush1.bf16.msra.mxu0 0
    %183 = vmatprep.subr.bf16.mxu0 0
    %184 = vmatpush1.bf16.msra.mxu0 0
    %185 = vmatprep.subr.bf16.mxu0 0
    %186 = vmatpush1.bf16.msra.mxu0 0
    %187 = vmatprep.subr.bf16.mxu0 0
    %188 = vmatpush1.bf16.msra.mxu0 0
    %189 = vmatprep.subr.bf16.mxu0 0
    %190 = vmatpush1.bf16.msra.mxu0 0
    %191 = vmatprep.subr.bf16.mxu0 0
    %192 = vmatpush1.bf16.msra.mxu0 0
    %193 = vmatprep.subr.bf16.mxu0 0
    %194 = vmatpush1.bf16.msra.mxu0 0
    %195 = vmatprep.mubr.bf16.mxu0 0
    %196 = vmatmul.mubr.bf16.gmra.mrb[0].mxu0 %v161
    %v197 = vpop.f32.mrb[0].mxu0
    %v198 = vadd.f32 0.0, %v197
    %v199 = vpop.f32.mrb[0].mxu0
    %v200 = vpop.f32.mrb[0].mxu0
    %v201 = vpop.f32.mrb[0].mxu0
    %202 = vdwg.mxu0
    %v203 = vadd.f32 %v139, %v198
    %v204 = vxor.u32 %v203, 2147483648
    %v205 = vmul.f32 %v204, 1.442695
    %v206 = vpow.pop %v205
    %v207 = vadd.f32 %v206, 1.0
    %v208 = vrcp.pop %v207
    %v209 = vmul.f32 1.0, %v208
    %v210 = vmul.f32 %v209, 2.0
    %v211 = vsub.f32 %v210, 1.0
    %v212 = vmul.f32 %v209, 0.01
    %214 = vrot.lane.b32.xlu0 %v211, 64
    %v215 = vpop.permute.xlu0 %214
    %v217 = vmul.f32 %v209, %v215
    %219 = vrot.lane.b32.xlu0 %v217, 32
    %v220 = vpop.permute.xlu0 %219
    %v222 = vadd.f32 %v212, %v220
    %v223 = vtanh.pop %v222
    %225 = vrot.lane.b32.xlu0 %v223, 64
    %v226 = vpop.permute.xlu0 %225
    %v228 = vmul.f32 %v209, %v226
    %v229 = vpack.c.bf16 %v228, %v228
    %231 = vrot.lane.b32.xlu0 %v229, 32
    %v232 = vpop.permute.xlu0 %231
    %v234 = vsel %vm159, %v232, 0
    %236 = vmatprep.subr.bf16.mxu0 0
    %237 = vmatpush1.bf16.msra.mxu0 %v155
    %238 = vmatprep.subr.bf16.mxu0 0
    %239 = vmatpush1.bf16.msra.mxu0 %v156
    %240 = vmatprep.subr.bf16.mxu0 0
    %241 = vmatpush1.bf16.msra.mxu0 0
    %242 = vmatprep.subr.bf16.mxu0 0
    %243 = vmatpush1.bf16.msra.mxu0 0
    %244 = vmatprep.subr.bf16.mxu0 0
    %245 = vmatpush1.bf16.msra.mxu0 0
    %246 = vmatprep.subr.bf16.mxu0 0
    %247 = vmatpush1.bf16.msra.mxu0 0
    %248 = vmatprep.subr.bf16.mxu0 0
    %249 = vmatpush1.bf16.msra.mxu0 0
    %250 = vmatprep.subr.bf16.mxu0 0
    %251 = vmatpush1.bf16.msra.mxu0 0
    %252 = vmatprep.subr.bf16.mxu0 0
    %253 = vmatpush1.bf16.msra.mxu0 0
    %254 = vmatprep.subr.bf16.mxu0 0
    %255 = vmatpush1.bf16.msra.mxu0 0
    %256 = vmatprep.subr.bf16.mxu0 0
    %257 = vmatpush1.bf16.msra.mxu0 0
    %258 = vmatprep.subr.bf16.mxu0 0
    %259 = vmatpush1.bf16.msra.mxu0 0
    %260 = vmatprep.subr.bf16.mxu0 0
    %261 = vmatpush1.bf16.msra.mxu0 0
    %262 = vmatprep.subr.bf16.mxu0 0
    %263 = vmatpush1.bf16.msra.mxu0 0
    %264 = vmatprep.subr.bf16.mxu0 0
    %265 = vmatpush1.bf16.msra.mxu0 0
    %266 = vmatprep.subr.bf16.mxu0 0
    %267 = vmatpush1.bf16.msra.mxu0 0
    %268 = vmatprep.mubr.bf16.mxu0 0
    %269 = vmatmul.mubr.bf16.gmra.mrb[0].mxu0 %v234
    %v270 = vpop.f32.mrb[0].mxu0
    %v271 = vadd.f32 0.0, %v270
    %v272 = vpop.f32.mrb[0].mxu0
    %v273 = vpop.f32.mrb[0].mxu0
    %v274 = vpop.f32.mrb[0].mxu0
    %275 = vdwg.mxu0
    %v276 = vadd.f32 %v139, %v271
    %v277 = vxor.u32 %v276, 2147483648
    %v278 = vmul.f32 %v277, 1.442695
    %v279 = vpow.pop %v278
    %v280 = vadd.f32 %v279, 1.0
    %v281 = vrcp.pop %v280
    %v282 = vmul.f32 1.0, %v281
    %v283 = vmul.f32 %v282, 2.0
    %v284 = vsub.f32 %v283, 1.0
    %v285 = vmul.f32 %v282, %v222
    %287 = vrot.lane.b32.xlu0 %v284, 64
    %v288 = vpop.permute.xlu0 %287
    %v290 = vmul.f32 %v282, %v288
    %292 = vrot.lane.b32.xlu0 %v290, 32
    %v293 = vpop.permute.xlu0 %292
    %v295 = vadd.f32 %v285, %v293
    %v296 = vtanh.pop %v295
    %298 = vrot.lane.b32.xlu0 %v296, 64
    %v299 = vpop.permute.xlu0 %298
    %v301 = vmul.f32 %v282, %v299
    %v302 = vpack.c.bf16 %v301, %v301
    %304 = vrot.lane.b32.xlu0 %v302, 32
    %v305 = vpop.permute.xlu0 %304
    %v307 = vsel %vm159, %v305, 0
    %309 = vmatprep.subr.bf16.mxu0 0
    %310 = vmatpush1.bf16.msra.mxu0 %v155
    %311 = vmatprep.subr.bf16.mxu0 0
    %312 = vmatpush1.bf16.msra.mxu0 %v156
    %313 = vmatprep.subr.bf16.mxu0 0
    %314 = vmatpush1.bf16.msra.mxu0 0
    %315 = vmatprep.subr.bf16.mxu0 0
    %316 = vmatpush1.bf16.msra.mxu0 0
    %317 = vmatprep.subr.bf16.mxu0 0
    %318 = vmatpush1.bf16.msra.mxu0 0
    %319 = vmatprep.subr.bf16.mxu0 0
    %320 = vmatpush1.bf16.msra.mxu0 0
    %321 = vmatprep.subr.bf16.mxu0 0
    %322 = vmatpush1.bf16.msra.mxu0 0
    %323 = vmatprep.subr.bf16.mxu0 0
    %324 = vmatpush1.bf16.msra.mxu0 0
    %325 = vmatprep.subr.bf16.mxu0 0
    %326 = vmatpush1.bf16.msra.mxu0 0
    %327 = vmatprep.subr.bf16.mxu0 0
    %328 = vmatpush1.bf16.msra.mxu0 0
    %329 = vmatprep.subr.bf16.mxu0 0
    %330 = vmatpush1.bf16.msra.mxu0 0
    %331 = vmatprep.subr.bf16.mxu0 0
    %332 = vmatpush1.bf16.msra.mxu0 0
    %333 = vmatprep.subr.bf16.mxu0 0
    %334 = vmatpush1.bf16.msra.mxu0 0
    %335 = vmatprep.subr.bf16.mxu0 0
    %336 = vmatpush1.bf16.msra.mxu0 0
    %337 = vmatprep.subr.bf16.mxu0 0
    %338 = vmatpush1.bf16.msra.mxu0 0
    %339 = vmatprep.subr.bf16.mxu0 0
    %340 = vmatpush1.bf16.msra.mxu0 0
    %341 = vmatprep.mubr.bf16.mxu0 0
    %342 = vmatmul.mubr.bf16.gmra.mrb[0].mxu0 %v307
    %v343 = vpop.f32.mrb[0].mxu0
    %v344 = vadd.f32 0.0, %v343
    %v345 = vpop.f32.mrb[0].mxu0
    %v346 = vpop.f32.mrb[0].mxu0
    %v347 = vpop.f32.mrb[0].mxu0
    %348 = vdwg.mxu0
    %v349 = vadd.f32 %v139, %v344
    %v350 = vxor.u32 %v349, 2147483648
    %v351 = vmul.f32 %v350, 1.442695
    %v352 = vpow.pop %v351
    %v353 = vadd.f32 %v352, 1.0
    %v354 = vrcp.pop %v353
    %v355 = vmul.f32 1.0, %v354
    %v356 = vmul.f32 %v355, 2.0
    %v357 = vsub.f32 %v356, 1.0
    %v358 = vmul.f32 %v355, %v295
    %360 = vrot.lane.b32.xlu0 %v357, 64
    %v361 = vpop.permute.xlu0 %360
    %v363 = vmul.f32 %v355, %v361
    %365 = vrot.lane.b32.xlu0 %v363, 32
    %v366 = vpop.permute.xlu0 %365
    %v368 = vadd.f32 %v358, %v366
    %v369 = vtanh.pop %v368
    %371 = vrot.lane.b32.xlu0 %v369, 64
    %v372 = vpop.permute.xlu0 %371
    %v374 = vmul.f32 %v355, %v372
    %v375 = vpack.c.bf16 %v374, %v374
    %377 = vrot.lane.b32.xlu0 %v375, 32
    %v378 = vpop.permute.xlu0 %377
    %v380 = vsel %vm159, %v378, 0
    %382 = vmatprep.subr.bf16.mxu0 0
    %383 = vmatpush1.bf16.msra.mxu0 %v155
    %384 = vmatprep.subr.bf16.mxu0 0
    %385 = vmatpush1.bf16.msra.mxu0 %v156
    %386 = vmatprep.subr.bf16.mxu0 0
    %387 = vmatpush1.bf16.msra.mxu0 0
    %388 = vmatprep.subr.bf16.mxu0 0
    %389 = vmatpush1.bf16.msra.mxu0 0
    %390 = vmatprep.subr.bf16.mxu0 0
    %391 = vmatpush1.bf16.msra.mxu0 0
    %392 = vmatprep.subr.bf16.mxu0 0
    %393 = vmatpush1.bf16.msra.mxu0 0
    %394 = vmatprep.subr.bf16.mxu0 0
    %395 = vmatpush1.bf16.msra.mxu0 0
    %396 = vmatprep.subr.bf16.mxu0 0
    %397 = vmatpush1.bf16.msra.mxu0 0
    %398 = vmatprep.subr.bf16.mxu0 0
    %399 = vmatpush1.bf16.msra.mxu0 0
    %400 = vmatprep.subr.bf16.mxu0 0
    %401 = vmatpush1.bf16.msra.mxu0 0
    %402 = vmatprep.subr.bf16.mxu0 0
    %403 = vmatpush1.bf16.msra.mxu0 0
    %404 = vmatprep.subr.bf16.mxu0 0
    %405 = vmatpush1.bf16.msra.mxu0 0
    %406 = vmatprep.subr.bf16.mxu0 0
    %407 = vmatpush1.bf16.msra.mxu0 0
    %408 = vmatprep.subr.bf16.mxu0 0
    %409 = vmatpush1.bf16.msra.mxu0 0
    %410 = vmatprep.subr.bf16.mxu0 0
    %411 = vmatpush1.bf16.msra.mxu0 0
    %412 = vmatprep.subr.bf16.mxu0 0
    %413 = vmatpush1.bf16.msra.mxu0 0
    %414 = vmatprep.mubr.bf16.mxu0 0
    %415 = vmatmul.mubr.bf16.gmra.mrb[0].mxu0 %v380
    %v416 = vpop.f32.mrb[0].mxu0
    %v417 = vadd.f32 0.0, %v416
    %v418 = vpop.f32.mrb[0].mxu0
    %v419 = vpop.f32.mrb[0].mxu0
    %v420 = vpop.f32.mrb[0].mxu0
    %421 = vdwg.mxu0
    %v422 = vadd.f32 %v139, %v417
    %v423 = vxor.u32 %v422, 2147483648
    %v424 = vmul.f32 %v423, 1.442695
    %v425 = vpow.pop %v424
    %v426 = vadd.f32 %v425, 1.0
    %v427 = vrcp.pop %v426
    %v428 = vmul.f32 1.0, %v427
    %v429 = vmul.f32 %v428, 2.0
    %v430 = vsub.f32 %v429, 1.0
    %v431 = vmul.f32 %v428, %v368
    %433 = vrot.lane.b32.xlu0 %v430, 64
    %v434 = vpop.permute.xlu0 %433
    %v436 = vmul.f32 %v428, %v434
    %438 = vrot.lane.b32.xlu0 %v436, 32
    %v439 = vpop.permute.xlu0 %438
    %v441 = vadd.f32 %v431, %v439
    %v442 = vtanh.pop %v441
    %444 = vrot.lane.b32.xlu0 %v442, 64
    %v445 = vpop.permute.xlu0 %444
    %v447 = vmul.f32 %v428, %v445
    %v448 = vpack.c.bf16 %v447, %v447
    %450 = vrot.lane.b32.xlu0 %v448, 32
    %v451 = vpop.permute.xlu0 %450
    %v453 = vsel %vm159, %v451, 0
    %455 = vmatprep.subr.bf16.mxu0 0
    %456 = vmatpush1.bf16.msra.mxu0 %v155
    %457 = vmatprep.subr.bf16.mxu0 0
    %458 = vmatpush1.bf16.msra.mxu0 %v156
    %459 = vmatprep.subr.bf16.mxu0 0
    %460 = vmatpush1.bf16.msra.mxu0 0
    %461 = vmatprep.subr.bf16.mxu0 0
    %462 = vmatpush1.bf16.msra.mxu0 0
    %463 = vmatprep.subr.bf16.mxu0 0
    %464 = vmatpush1.bf16.msra.mxu0 0
    %465 = vmatprep.subr.bf16.mxu0 0
    %466 = vmatpush1.bf16.msra.mxu0 0
    %467 = vmatprep.subr.bf16.mxu0 0
    %468 = vmatpush1.bf16.msra.mxu0 0
    %469 = vmatprep.subr.bf16.mxu0 0
    %470 = vmatpush1.bf16.msra.mxu0 0
    %471 = vmatprep.subr.bf16.mxu0 0
    %472 = vmatpush1.bf16.msra.mxu0 0
    %473 = vmatprep.subr.bf16.mxu0 0
    %474 = vmatpush1.bf16.msra.mxu0 0
    %475 = vmatprep.subr.bf16.mxu0 0
    %476 = vmatpush1.bf16.msra.mxu0 0
    %477 = vmatprep.subr.bf16.mxu0 0
    %478 = vmatpush1.bf16.msra.mxu0 0
    %479 = vmatprep.subr.bf16.mxu0 0
    %480 = vmatpush1.bf16.msra.mxu0 0
    %481 = vmatprep.subr.bf16.mxu0 0
    %482 = vmatpush1.bf16.msra.mxu0 0
    %483 = vmatprep.subr.bf16.mxu0 0
    %484 = vmatpush1.bf16.msra.mxu0 0
    %485 = vmatprep.subr.bf16.mxu0 0
    %486 = vmatpush1.bf16.msra.mxu0 0
    %487 = vmatprep.mubr.bf16.mxu0 0
    %488 = vmatmul.mubr.bf16.gmra.mrb[0].mxu0 %v453
    %v489 = vpop.f32.mrb[0].mxu0
    %v490 = vadd.f32 0.0, %v489
    %v491 = vpop.f32.mrb[0].mxu0
    %v492 = vpop.f32.mrb[0].mxu0
    %v493 = vpop.f32.mrb[0].mxu0
    %494 = vdwg.mxu0
    %v495 = vadd.f32 %v139, %v490
    %v496 = vxor.u32 %v495, 2147483648
    %v497 = vmul.f32 %v496, 1.442695
    %v498 = vpow.pop %v497
    %v499 = vadd.f32 %v498, 1.0
    %v500 = vrcp.pop %v499
    %v501 = vmul.f32 1.0, %v500
    %v502 = vmul.f32 %v501, 2.0
    %v503 = vsub.f32 %v502, 1.0
    %v504 = vmul.f32 %v501, %v441
    %506 = vrot.lane.b32.xlu0 %v503, 64
    %v507 = vpop.permute.xlu0 %506
    %v509 = vmul.f32 %v501, %v507
    %511 = vrot.lane.b32.xlu0 %v509, 32
    %v512 = vpop.permute.xlu0 %511
    %v514 = vadd.f32 %v504, %v512
    %v515 = vtanh.pop %v514
    %517 = vrot.lane.b32.xlu0 %v515, 64
    %v518 = vpop.permute.xlu0 %517
    %v520 = vmul.f32 %v501, %v518
    %v521 = vpack.c.bf16 %v520, %v520
    %523 = vrot.lane.b32.xlu0 %v521, 32
    %v524 = vpop.permute.xlu0 %523
    %v526 = vsel %vm159, %v524, 0
    %528 = vmatprep.subr.bf16.mxu0 0
    %529 = vmatpush1.bf16.msra.mxu0 %v155
    %530 = vmatprep.subr.bf16.mxu0 0
    %531 = vmatpush1.bf16.msra.mxu0 %v156
    %532 = vmatprep.subr.bf16.mxu0 0
    %533 = vmatpush1.bf16.msra.mxu0 0
    %534 = vmatprep.subr.bf16.mxu0 0
    %535 = vmatpush1.bf16.msra.mxu0 0
    %536 = vmatprep.subr.bf16.mxu0 0
    %537 = vmatpush1.bf16.msra.mxu0 0
    %538 = vmatprep.subr.bf16.mxu0 0
    %539 = vmatpush1.bf16.msra.mxu0 0
    %540 = vmatprep.subr.bf16.mxu0 0
    %541 = vmatpush1.bf16.msra.mxu0 0
    %542 = vmatprep.subr.bf16.mxu0 0
    %543 = vmatpush1.bf16.msra.mxu0 0
    %544 = vmatprep.subr.bf16.mxu0 0
    %545 = vmatpush1.bf16.msra.mxu0 0
    %546 = vmatprep.subr.bf16.mxu0 0
    %547 = vmatpush1.bf16.msra.mxu0 0
    %548 = vmatprep.subr.bf16.mxu0 0
    %549 = vmatpush1.bf16.msra.mxu0 0
    %550 = vmatprep.subr.bf16.mxu0 0
    %551 = vmatpush1.bf16.msra.mxu0 0
    %552 = vmatprep.subr.bf16.mxu0 0
    %553 = vmatpush1.bf16.msra.mxu0 0
    %554 = vmatprep.subr.bf16.mxu0 0
    %555 = vmatpush1.bf16.msra.mxu0 0
    %556 = vmatprep.subr.bf16.mxu0 0
    %557 = vmatpush1.bf16.msra.mxu0 0
    %558 = vmatprep.subr.bf16.mxu0 0
    %559 = vmatpush1.bf16.msra.mxu0 0
    %560 = vmatprep.mubr.bf16.mxu0 0
    %561 = vmatmul.mubr.bf16.gmra.mrb[0].mxu0 %v526
    %v562 = vpop.f32.mrb[0].mxu0
    %v563 = vadd.f32 0.0, %v562
    %v564 = vpop.f32.mrb[0].mxu0
    %v565 = vpop.f32.mrb[0].mxu0
    %v566 = vpop.f32.mrb[0].mxu0
    %567 = vdwg.mxu0
    %v568 = vadd.f32 %v139, %v563
    %v569 = vxor.u32 %v568, 2147483648
    %v570 = vmul.f32 %v569, 1.442695
    %v571 = vpow.pop %v570
    %v572 = vadd.f32 %v571, 1.0
    %v573 = vrcp.pop %v572
    %v574 = vmul.f32 1.0, %v573
    %v575 = vmul.f32 %v574, 2.0
    %v576 = vsub.f32 %v575, 1.0
    %v577 = vmul.f32 %v574, %v514
    %579 = vrot.lane.b32.xlu0 %v576, 64
    %v580 = vpop.permute.xlu0 %579
    %v582 = vmul.f32 %v574, %v580
    %584 = vrot.lane.b32.xlu0 %v582, 32
    %v585 = vpop.permute.xlu0 %584
    %v587 = vadd.f32 %v577, %v585
    %v588 = vtanh.pop %v587
    %590 = vrot.lane.b32.xlu0 %v588, 64
    %v591 = vpop.permute.xlu0 %590
    %v593 = vmul.f32 %v574, %v591
    %v594 = vpack.c.bf16 %v593, %v593
    %596 = vrot.lane.b32.xlu0 %v594, 32
    %v597 = vpop.permute.xlu0 %596
    %v599 = vsel %vm159, %v597, 0
    %601 = vmatprep.subr.bf16.mxu0 0
    %602 = vmatpush1.bf16.msra.mxu0 %v155
    %603 = vmatprep.subr.bf16.mxu0 0
    %604 = vmatpush1.bf16.msra.mxu0 %v156
    %605 = vmatprep.subr.bf16.mxu0 0
    %606 = vmatpush1.bf16.msra.mxu0 0
    %607 = vmatprep.subr.bf16.mxu0 0
    %608 = vmatpush1.bf16.msra.mxu0 0
    %609 = vmatprep.subr.bf16.mxu0 0
    %610 = vmatpush1.bf16.msra.mxu0 0
    %611 = vmatprep.subr.bf16.mxu0 0
    %612 = vmatpush1.bf16.msra.mxu0 0
    %613 = vmatprep.subr.bf16.mxu0 0
    %614 = vmatpush1.bf16.msra.mxu0 0
    %615 = vmatprep.subr.bf16.mxu0 0
    %616 = vmatpush1.bf16.msra.mxu0 0
    %617 = vmatprep.subr.bf16.mxu0 0
    %618 = vmatpush1.bf16.msra.mxu0 0
    %619 = vmatprep.subr.bf16.mxu0 0
    %620 = vmatpush1.bf16.msra.mxu0 0
    %621 = vmatprep.subr.bf16.mxu0 0
    %622 = vmatpush1.bf16.msra.mxu0 0
    %623 = vmatprep.subr.bf16.mxu0 0
    %624 = vmatpush1.bf16.msra.mxu0 0
    %625 = vmatprep.subr.bf16.mxu0 0
    %626 = vmatpush1.bf16.msra.mxu0 0
    %627 = vmatprep.subr.bf16.mxu0 0
    %628 = vmatpush1.bf16.msra.mxu0 0
    %629 = vmatprep.subr.bf16.mxu0 0
    %630 = vmatpush1.bf16.msra.mxu0 0
    %631 = vmatprep.subr.bf16.mxu0 0
    %632 = vmatpush1.bf16.msra.mxu0 0
    %633 = vmatprep.mubr.bf16.mxu0 0
    %634 = vmatmul.mubr.bf16.gmra.mrb[0].mxu0 %v599
    %v635 = vpop.f32.mrb[0].mxu0
    %v636 = vadd.f32 0.0, %v635
    %v637 = vpop.f32.mrb[0].mxu0
    %v638 = vpop.f32.mrb[0].mxu0
    %v639 = vpop.f32.mrb[0].mxu0
    %640 = vdwg.mxu0
    %v641 = vadd.f32 %v139, %v636
    %v642 = vxor.u32 %v641, 2147483648
    %v643 = vmul.f32 %v642, 1.442695
    %v644 = vpow.pop %v643
    %v645 = vadd.f32 %v644, 1.0
    %v646 = vrcp.pop %v645
    %v647 = vmul.f32 1.0, %v646
    %v648 = vmul.f32 %v647, 2.0
    %v649 = vsub.f32 %v648, 1.0
    %v650 = vmul.f32 %v647, %v587
    %652 = vrot.lane.b32.xlu0 %v649, 64
    %v653 = vpop.permute.xlu0 %652
    %v655 = vmul.f32 %v647, %v653
    %657 = vrot.lane.b32.xlu0 %v655, 32
    %v658 = vpop.permute.xlu0 %657
    %v660 = vadd.f32 %v650, %v658
    %v661 = vtanh.pop %v660
    %663 = vrot.lane.b32.xlu0 %v661, 64
    %v664 = vpop.permute.xlu0 %663
    %v666 = vmul.f32 %v647, %v664
    %v667 = vpack.c.bf16 %v666, %v666
    %669 = vrot.lane.b32.xlu0 %v667, 32
    %v670 = vpop.permute.xlu0 %669
    %v672 = vsel %vm159, %v670, 0
    %674 = vmatprep.subr.bf16.mxu0 0
    %675 = vmatpush1.bf16.msra.mxu0 %v155
    %676 = vmatprep.subr.bf16.mxu0 0
    %677 = vmatpush1.bf16.msra.mxu0 %v156
    %678 = vmatprep.subr.bf16.mxu0 0
    %679 = vmatpush1.bf16.msra.mxu0 0
    %680 = vmatprep.subr.bf16.mxu0 0
    %681 = vmatpush1.bf16.msra.mxu0 0
    %682 = vmatprep.subr.bf16.mxu0 0
    %683 = vmatpush1.bf16.msra.mxu0 0
    %684 = vmatprep.subr.bf16.mxu0 0
    %685 = vmatpush1.bf16.msra.mxu0 0
    %686 = vmatprep.subr.bf16.mxu0 0
    %687 = vmatpush1.bf16.msra.mxu0 0
    %688 = vmatprep.subr.bf16.mxu0 0
    %689 = vmatpush1.bf16.msra.mxu0 0
    %690 = vmatprep.subr.bf16.mxu0 0
    %691 = vmatpush1.bf16.msra.mxu0 0
    %692 = vmatprep.subr.bf16.mxu0 0
    %693 = vmatpush1.bf16.msra.mxu0 0
    %694 = vmatprep.subr.bf16.mxu0 0
    %695 = vmatpush1.bf16.msra.mxu0 0
    %696 = vmatprep.subr.bf16.mxu0 0
    %697 = vmatpush1.bf16.msra.mxu0 0
    %698 = vmatprep.subr.bf16.mxu0 0
    %699 = vmatpush1.bf16.msra.mxu0 0
    %700 = vmatprep.subr.bf16.mxu0 0
    %701 = vmatpush1.bf16.msra.mxu0 0
    %702 = vmatprep.subr.bf16.mxu0 0
    %703 = vmatpush1.bf16.msra.mxu0 0
    %704 = vmatprep.subr.bf16.mxu0 0
    %705 = vmatpush1.bf16.msra.mxu0 0
    %706 = vmatprep.mubr.bf16.mxu0 0
    %707 = vmatmul.mubr.bf16.gmra.mrb[0].mxu0 %v672
    %v708 = vpop.f32.mrb[0].mxu0
    %v709 = vadd.f32 0.0, %v708
    %v710 = vpop.f32.mrb[0].mxu0
    %v711 = vpop.f32.mrb[0].mxu0
    %v712 = vpop.f32.mrb[0].mxu0
    %713 = vdwg.mxu0
    %v714 = vadd.f32 %v139, %v709
    %v715 = vxor.u32 %v714, 2147483648
    %v716 = vmul.f32 %v715, 1.442695
    %v717 = vpow.pop %v716
    %v718 = vadd.f32 %v717, 1.0
    %v719 = vrcp.pop %v718
    %v720 = vmul.f32 1.0, %v719
    %v721 = vmul.f32 %v720, 2.0
    %v722 = vsub.f32 %v721, 1.0
    %v723 = vmul.f32 %v720, %v660
    %725 = vrot.lane.b32.xlu0 %v722, 64
    %v726 = vpop.permute.xlu0 %725
    %v728 = vmul.f32 %v720, %v726
    %730 = vrot.lane.b32.xlu0 %v728, 32
    %v731 = vpop.permute.xlu0 %730
    %v733 = vadd.f32 %v723, %v731
    %v734 = vtanh.pop %v733
    %736 = vrot.lane.b32.xlu0 %v734, 64
    %v737 = vpop.permute.xlu0 %736
    %v739 = vmul.f32 %v720, %v737
    %v740 = vpack.c.bf16 %v739, %v739
    %742 = vrot.lane.b32.xlu0 %v740, 32
    %v743 = vpop.permute.xlu0 %742
    %v745 = vsel %vm159, %v743, 0
    %747 = vmatprep.subr.bf16.mxu0 0
    %748 = vmatpush1.bf16.msra.mxu0 %v155
    %749 = vmatprep.subr.bf16.mxu0 0
    %750 = vmatpush1.bf16.msra.mxu0 %v156
    %751 = vmatprep.subr.bf16.mxu0 0
    %752 = vmatpush1.bf16.msra.mxu0 0
    %753 = vmatprep.subr.bf16.mxu0 0
    %754 = vmatpush1.bf16.msra.mxu0 0
    %755 = vmatprep.subr.bf16.mxu0 0
    %756 = vmatpush1.bf16.msra.mxu0 0
    %757 = vmatprep.subr.bf16.mxu0 0
    %758 = vmatpush1.bf16.msra.mxu0 0
    %759 = vmatprep.subr.bf16.mxu0 0
    %760 = vmatpush1.bf16.msra.mxu0 0
    %761 = vmatprep.subr.bf16.mxu0 0
    %762 = vmatpush1.bf16.msra.mxu0 0
    %763 = vmatprep.subr.bf16.mxu0 0
    %764 = vmatpush1.bf16.msra.mxu0 0
    %765 = vmatprep.subr.bf16.mxu0 0
    %766 = vmatpush1.bf16.msra.mxu0 0
    %767 = vmatprep.subr.bf16.mxu0 0
    %768 = vmatpush1.bf16.msra.mxu0 0
    %769 = vmatprep.subr.bf16.mxu0 0
    %770 = vmatpush1.bf16.msra.mxu0 0
    %771 = vmatprep.subr.bf16.mxu0 0
    %772 = vmatpush1.bf16.msra.mxu0 0
    %773 = vmatprep.subr.bf16.mxu0 0
    %774 = vmatpush1.bf16.msra.mxu0 0
    %775 = vmatprep.subr.bf16.mxu0 0
    %776 = vmatpush1.bf16.msra.mxu0 0
    %777 = vmatprep.subr.bf16.mxu0 0
    %778 = vmatpush1.bf16.msra.mxu0 0
    %779 = vmatprep.mubr.bf16.mxu0 0
    %780 = vmatmul.mubr.bf16.gmra.mrb[0].mxu0 %v745
    %v781 = vpop.f32.mrb[0].mxu0
    %v782 = vadd.f32 0.0, %v781
    %v783 = vpop.f32.mrb[0].mxu0
    %v784 = vpop.f32.mrb[0].mxu0
    %v785 = vpop.f32.mrb[0].mxu0
    %786 = vdwg.mxu0
    %v787 = vadd.f32 %v139, %v782
    %v788 = vxor.u32 %v787, 2147483648
    %v789 = vmul.f32 %v788, 1.442695
    %v790 = vpow.pop %v789
    %v791 = vadd.f32 %v790, 1.0
    %v792 = vrcp.pop %v791
    %v793 = vmul.f32 1.0, %v792
    %v794 = vmul.f32 %v793, 2.0
    %v795 = vsub.f32 %v794, 1.0
    %v796 = vmul.f32 %v793, %v733
    %798 = vrot.lane.b32.xlu0 %v795, 64
    %v799 = vpop.permute.xlu0 %798
    %v801 = vmul.f32 %v793, %v799
    %803 = vrot.lane.b32.xlu0 %v801, 32
    %v804 = vpop.permute.xlu0 %803
    %v806 = vadd.f32 %v796, %v804
    %v807 = vtanh.pop %v806
    %809 = vrot.lane.b32.xlu0 %v807, 64
    %v810 = vpop.permute.xlu0 %809
    %v812 = vmul.f32 %v793, %v810
    %v813 = vpack.c.bf16 %v812, %v812
    %815 = vrot.lane.b32.xlu0 %v813, 32
    %v816 = vpop.permute.xlu0 %815
    %v818 = vsel %vm159, %v816, 0
    %820 = vmatprep.subr.bf16.mxu0 0
    %821 = vmatpush1.bf16.msra.mxu0 %v155
    %822 = vmatprep.subr.bf16.mxu0 0
    %823 = vmatpush1.bf16.msra.mxu0 %v156
    %824 = vmatprep.subr.bf16.mxu0 0
    %825 = vmatpush1.bf16.msra.mxu0 0
    %826 = vmatprep.subr.bf16.mxu0 0
    %827 = vmatpush1.bf16.msra.mxu0 0
    %828 = vmatprep.subr.bf16.mxu0 0
    %829 = vmatpush1.bf16.msra.mxu0 0
    %830 = vmatprep.subr.bf16.mxu0 0
    %831 = vmatpush1.bf16.msra.mxu0 0
    %832 = vmatprep.subr.bf16.mxu0 0
    %833 = vmatpush1.bf16.msra.mxu0 0
    %834 = vmatprep.subr.bf16.mxu0 0
    %835 = vmatpush1.bf16.msra.mxu0 0
    %836 = vmatprep.subr.bf16.mxu0 0
    %837 = vmatpush1.bf16.msra.mxu0 0
    %838 = vmatprep.subr.bf16.mxu0 0
    %839 = vmatpush1.bf16.msra.mxu0 0
    %840 = vmatprep.subr.bf16.mxu0 0
    %841 = vmatpush1.bf16.msra.mxu0 0
    %842 = vmatprep.subr.bf16.mxu0 0
    %843 = vmatpush1.bf16.msra.mxu0 0
    %844 = vmatprep.subr.bf16.mxu0 0
    %845 = vmatpush1.bf16.msra.mxu0 0
    %846 = vmatprep.subr.bf16.mxu0 0
    %847 = vmatpush1.bf16.msra.mxu0 0
    %848 = vmatprep.subr.bf16.mxu0 0
    %849 = vmatpush1.bf16.msra.mxu0 0
    %850 = vmatprep.subr.bf16.mxu0 0
    %851 = vmatpush1.bf16.msra.mxu0 0
    %852 = vmatprep.mubr.bf16.mxu0 0
    %853 = vmatmul.mubr.bf16.gmra.mrb[0].mxu0 %v818
    %v854 = vpop.f32.mrb[0].mxu0
    %v855 = vadd.f32 0.0, %v854
    %v856 = vpop.f32.mrb[0].mxu0
    %v857 = vpop.f32.mrb[0].mxu0
    %v858 = vpop.f32.mrb[0].mxu0
    %859 = vdwg.mxu0
    %v860 = vadd.f32 %v139, %v855
    %v861 = vxor.u32 %v860, 2147483648
    %v862 = vmul.f32 %v861, 1.442695
    %v863 = vpow.pop %v862
    %v864 = vadd.f32 %v863, 1.0
    %v865 = vrcp.pop %v864
    %v866 = vmul.f32 1.0, %v865
    %v867 = vmul.f32 %v866, 2.0
    %v868 = vsub.f32 %v867, 1.0
    %v869 = vmul.f32 %v866, %v806
    %871 = vrot.lane.b32.xlu0 %v868, 64
    %v872 = vpop.permute.xlu0 %871
    %v874 = vmul.f32 %v866, %v872
    %876 = vrot.lane.b32.xlu0 %v874, 32
    %v877 = vpop.permute.xlu0 %876
    %v879 = vadd.f32 %v869, %v877
    %v880 = vtanh.pop %v879
    %882 = vrot.lane.b32.xlu0 %v880, 64
    %v883 = vpop.permute.xlu0 %882
    %v885 = vmul.f32 %v866, %v883
    %v886 = vpack.c.bf16 %v885, %v885
    %888 = vrot.lane.b32.xlu0 %v886, 32
    %v889 = vpop.permute.xlu0 %888
    %v891 = vsel %vm159, %v889, 0
    %893 = vmatprep.subr.bf16.mxu0 0
    %894 = vmatpush1.bf16.msra.mxu0 %v155
    %895 = vmatprep.subr.bf16.mxu0 0
    %896 = vmatpush1.bf16.msra.mxu0 %v156
    %897 = vmatprep.subr.bf16.mxu0 0
    %898 = vmatpush1.bf16.msra.mxu0 0
    %899 = vmatprep.subr.bf16.mxu0 0
    %900 = vmatpush1.bf16.msra.mxu0 0
    %901 = vmatprep.subr.bf16.mxu0 0
    %902 = vmatpush1.bf16.msra.mxu0 0
    %903 = vmatprep.subr.bf16.mxu0 0
    %904 = vmatpush1.bf16.msra.mxu0 0
    %905 = vmatprep.subr.bf16.mxu0 0
    %906 = vmatpush1.bf16.msra.mxu0 0
    %907 = vmatprep.subr.bf16.mxu0 0
    %908 = vmatpush1.bf16.msra.mxu0 0
    %909 = vmatprep.subr.bf16.mxu0 0
    %910 = vmatpush1.bf16.msra.mxu0 0
    %911 = vmatprep.subr.bf16.mxu0 0
    %912 = vmatpush1.bf16.msra.mxu0 0
    %913 = vmatprep.subr.bf16.mxu0 0
    %914 = vmatpush1.bf16.msra.mxu0 0
    %915 = vmatprep.subr.bf16.mxu0 0
    %916 = vmatpush1.bf16.msra.mxu0 0
    %917 = vmatprep.subr.bf16.mxu0 0
    %918 = vmatpush1.bf16.msra.mxu0 0
    %919 = vmatprep.subr.bf16.mxu0 0
    %920 = vmatpush1.bf16.msra.mxu0 0
    %921 = vmatprep.subr.bf16.mxu0 0
    %922 = vmatpush1.bf16.msra.mxu0 0
    %923 = vmatprep.subr.bf16.mxu0 0
    %924 = vmatpush1.bf16.msra.mxu0 0
    %925 = vmatprep.mubr.bf16.mxu0 0
    %926 = vmatmul.mubr.bf16.gmra.mrb[0].mxu0 %v891
    %v927 = vpop.f32.mrb[0].mxu0
    %v928 = vadd.f32 0.0, %v927
    %v929 = vpop.f32.mrb[0].mxu0
    %v930 = vpop.f32.mrb[0].mxu0
    %v931 = vpop.f32.mrb[0].mxu0
    %932 = vdwg.mxu0
    %v933 = vadd.f32 %v139, %v928
    %v934 = vxor.u32 %v933, 2147483648
    %v935 = vmul.f32 %v934, 1.442695
    %v936 = vpow.pop %v935
    %v937 = vadd.f32 %v936, 1.0
    %v938 = vrcp.pop %v937
    %v939 = vmul.f32 1.0, %v938
    %v940 = vmul.f32 %v939, 2.0
    %v941 = vsub.f32 %v940, 1.0
    %v942 = vmul.f32 %v939, %v879
    %944 = vrot.lane.b32.xlu0 %v941, 64
    %v945 = vpop.permute.xlu0 %944
    %v947 = vmul.f32 %v939, %v945
    %949 = vrot.lane.b32.xlu0 %v947, 32
    %v950 = vpop.permute.xlu0 %949
    %v952 = vadd.f32 %v942, %v950
    %v953 = vtanh.pop %v952
    %955 = vrot.lane.b32.xlu0 %v953, 64
    %v956 = vpop.permute.xlu0 %955
    %v958 = vmul.f32 %v939, %v956
    %v959 = vpack.c.bf16 %v958, %v958
    %961 = vrot.lane.b32.xlu0 %v959, 32
    %v962 = vpop.permute.xlu0 %961
    %v964 = vsel %vm159, %v962, 0
    %966 = vmatprep.subr.bf16.mxu0 0
    %967 = vmatpush1.bf16.msra.mxu0 %v155
    %968 = vmatprep.subr.bf16.mxu0 0
    %969 = vmatpush1.bf16.msra.mxu0 %v156
    %970 = vmatprep.subr.bf16.mxu0 0
    %971 = vmatpush1.bf16.msra.mxu0 0
    %972 = vmatprep.subr.bf16.mxu0 0
    %973 = vmatpush1.bf16.msra.mxu0 0
    %974 = vmatprep.subr.bf16.mxu0 0
    %975 = vmatpush1.bf16.msra.mxu0 0
    %976 = vmatprep.subr.bf16.mxu0 0
    %977 = vmatpush1.bf16.msra.mxu0 0
    %978 = vmatprep.subr.bf16.mxu0 0
    %979 = vmatpush1.bf16.msra.mxu0 0
    %980 = vmatprep.subr.bf16.mxu0 0
    %981 = vmatpush1.bf16.msra.mxu0 0
    %982 = vmatprep.subr.bf16.mxu0 0
    %983 = vmatpush1.bf16.msra.mxu0 0
    %984 = vmatprep.subr.bf16.mxu0 0
    %985 = vmatpush1.bf16.msra.mxu0 0
    %986 = vmatprep.subr.bf16.mxu0 0
    %987 = vmatpush1.bf16.msra.mxu0 0
    %988 = vmatprep.subr.bf16.mxu0 0
    %989 = vmatpush1.bf16.msra.mxu0 0
    %990 = vmatprep.subr.bf16.mxu0 0
    %991 = vmatpush1.bf16.msra.mxu0 0
    %992 = vmatprep.subr.bf16.mxu0 0
    %993 = vmatpush1.bf16.msra.mxu0 0
    %994 = vmatprep.subr.bf16.mxu0 0
    %995 = vmatpush1.bf16.msra.mxu0 0
    %996 = vmatprep.subr.bf16.mxu0 0
    %997 = vmatpush1.bf16.msra.mxu0 0
    %998 = vmatprep.mubr.bf16.mxu0 0
    %999 = vmatmul.mubr.bf16.gmra.mrb[0].mxu0 %v964
    %v1000 = vpop.f32.mrb[0].mxu0
    %v1001 = vadd.f32 0.0, %v1000
    %v1002 = vpop.f32.mrb[0].mxu0
    %v1003 = vpop.f32.mrb[0].mxu0
    %v1004 = vpop.f32.mrb[0].mxu0
    %1005 = vdwg.mxu0
    %v1006 = vadd.f32 %v139, %v1001
    %v1007 = vxor.u32 %v1006, 2147483648
    %v1008 = vmul.f32 %v1007, 1.442695
    %v1009 = vpow.pop %v1008
    %v1010 = vadd.f32 %v1009, 1.0
    %v1011 = vrcp.pop %v1010
    %v1012 = vmul.f32 1.0, %v1011
    %v1013 = vmul.f32 %v1012, 2.0
    %v1014 = vsub.f32 %v1013, 1.0
    %v1015 = vmul.f32 %v1012, %v952
    %1017 = vrot.lane.b32.xlu0 %v1014, 64
    %v1018 = vpop.permute.xlu0 %1017
    %v1020 = vmul.f32 %v1012, %v1018
    %1022 = vrot.lane.b32.xlu0 %v1020, 32
    %v1023 = vpop.permute.xlu0 %1022
    %v1025 = vadd.f32 %v1015, %v1023
    %v1026 = vtanh.pop %v1025
    %1028 = vrot.lane.b32.xlu0 %v1026, 64
    %v1029 = vpop.permute.xlu0 %1028
    %v1031 = vmul.f32 %v1012, %v1029
    %v1032 = vpack.c.bf16 %v1031, %v1031
    %1034 = vrot.lane.b32.xlu0 %v1032, 32
    %v1035 = vpop.permute.xlu0 %1034
    %v1037 = vsel %vm159, %v1035, 0
    %1039 = vmatprep.subr.bf16.mxu0 0
    %1040 = vmatpush1.bf16.msra.mxu0 %v155
    %1041 = vmatprep.subr.bf16.mxu0 0
    %1042 = vmatpush1.bf16.msra.mxu0 %v156
    %1043 = vmatprep.subr.bf16.mxu0 0
    %1044 = vmatpush1.bf16.msra.mxu0 0
    %1045 = vmatprep.subr.bf16.mxu0 0
    %1046 = vmatpush1.bf16.msra.mxu0 0
    %1047 = vmatprep.subr.bf16.mxu0 0
    %1048 = vmatpush1.bf16.msra.mxu0 0
    %1049 = vmatprep.subr.bf16.mxu0 0
    %1050 = vmatpush1.bf16.msra.mxu0 0
    %1051 = vmatprep.subr.bf16.mxu0 0
    %1052 = vmatpush1.bf16.msra.mxu0 0
    %1053 = vmatprep.subr.bf16.mxu0 0
    %1054 = vmatpush1.bf16.msra.mxu0 0
    %1055 = vmatprep.subr.bf16.mxu0 0
    %1056 = vmatpush1.bf16.msra.mxu0 0
    %1057 = vmatprep.subr.bf16.mxu0 0
    %1058 = vmatpush1.bf16.msra.mxu0 0
    %1059 = vmatprep.subr.bf16.mxu0 0
    %1060 = vmatpush1.bf16.msra.mxu0 0
    %1061 = vmatprep.subr.bf16.mxu0 0
    %1062 = vmatpush1.bf16.msra.mxu0 0
    %1063 = vmatprep.subr.bf16.mxu0 0
    %1064 = vmatpush1.bf16.msra.mxu0 0
    %1065 = vmatprep.subr.bf16.mxu0 0
    %1066 = vmatpush1.bf16.msra.mxu0 0
    %1067 = vmatprep.subr.bf16.mxu0 0
    %1068 = vmatpush1.bf16.msra.mxu0 0
    %1069 = vmatprep.subr.bf16.mxu0 0
    %1070 = vmatpush1.bf16.msra.mxu0 0
    %1071 = vmatprep.mubr.bf16.mxu0 0
    %1072 = vmatmul.mubr.bf16.gmra.mrb[0].mxu0 %v1037
    %v1073 = vpop.f32.mrb[0].mxu0
    %v1074 = vadd.f32 0.0, %v1073
    %v1075 = vpop.f32.mrb[0].mxu0
    %v1076 = vpop.f32.mrb[0].mxu0
    %v1077 = vpop.f32.mrb[0].mxu0
    %1078 = vdwg.mxu0
    %v1079 = vadd.f32 %v139, %v1074
    %v1080 = vxor.u32 %v1079, 2147483648
    %v1081 = vmul.f32 %v1080, 1.442695
    %v1082 = vpow.pop %v1081
    %v1083 = vadd.f32 %v1082, 1.0
    %v1084 = vrcp.pop %v1083
    %v1085 = vmul.f32 1.0, %v1084
    %v1086 = vmul.f32 %v1085, 2.0
    %v1087 = vsub.f32 %v1086, 1.0
    %v1088 = vmul.f32 %v1085, %v1025
    %1090 = vrot.lane.b32.xlu0 %v1087, 64
    %v1091 = vpop.permute.xlu0 %1090
    %v1093 = vmul.f32 %v1085, %v1091
    %1095 = vrot.lane.b32.xlu0 %v1093, 32
    %v1096 = vpop.permute.xlu0 %1095
    %v1098 = vadd.f32 %v1088, %v1096
    %v1099 = vtanh.pop %v1098
    %1101 = vrot.lane.b32.xlu0 %v1099, 64
    %v1102 = vpop.permute.xlu0 %1101
    %v1104 = vmul.f32 %v1085, %v1102
    %v1105 = vpack.c.bf16 %v1104, %v1104
    %1107 = vrot.lane.b32.xlu0 %v1105, 32
    %v1108 = vpop.permute.xlu0 %1107
    %v1110 = vsel %vm159, %v1108, 0
    %1112 = vmatprep.subr.bf16.mxu0 0
    %1113 = vmatpush1.bf16.msra.mxu0 %v155
    %1114 = vmatprep.subr.bf16.mxu0 0
    %1115 = vmatpush1.bf16.msra.mxu0 %v156
    %1116 = vmatprep.subr.bf16.mxu0 0
    %1117 = vmatpush1.bf16.msra.mxu0 0
    %1118 = vmatprep.subr.bf16.mxu0 0
    %1119 = vmatpush1.bf16.msra.mxu0 0
    %1120 = vmatprep.subr.bf16.mxu0 0
    %1121 = vmatpush1.bf16.msra.mxu0 0
    %1122 = vmatprep.subr.bf16.mxu0 0
    %1123 = vmatpush1.bf16.msra.mxu0 0
    %1124 = vmatprep.subr.bf16.mxu0 0
    %1125 = vmatpush1.bf16.msra.mxu0 0
    %1126 = vmatprep.subr.bf16.mxu0 0
    %1127 = vmatpush1.bf16.msra.mxu0 0
    %1128 = vmatprep.subr.bf16.mxu0 0
    %1129 = vmatpush1.bf16.msra.mxu0 0
    %1130 = vmatprep.subr.bf16.mxu0 0
    %1131 = vmatpush1.bf16.msra.mxu0 0
    %1132 = vmatprep.subr.bf16.mxu0 0
    %1133 = vmatpush1.bf16.msra.mxu0 0
    %1134 = vmatprep.subr.bf16.mxu0 0
    %1135 = vmatpush1.bf16.msra.mxu0 0
    %1136 = vmatprep.subr.bf16.mxu0 0
    %1137 = vmatpush1.bf16.msra.mxu0 0
    %1138 = vmatprep.subr.bf16.mxu0 0
    %1139 = vmatpush1.bf16.msra.mxu0 0
    %1140 = vmatprep.subr.bf16.mxu0 0
    %1141 = vmatpush1.bf16.msra.mxu0 0
    %1142 = vmatprep.subr.bf16.mxu0 0
    %1143 = vmatpush1.bf16.msra.mxu0 0
    %1144 = vmatprep.mubr.bf16.mxu0 0
    %1145 = vmatmul.mubr.bf16.gmra.mrb[0].mxu0 %v1110
    %v1146 = vpop.f32.mrb[0].mxu0
    %v1147 = vadd.f32 0.0, %v1146
    %v1148 = vpop.f32.mrb[0].mxu0
    %v1149 = vpop.f32.mrb[0].mxu0
    %v1150 = vpop.f32.mrb[0].mxu0
    %1151 = vdwg.mxu0
    %v1152 = vadd.f32 %v139, %v1147
    %v1153 = vxor.u32 %v1152, 2147483648
    %v1154 = vmul.f32 %v1153, 1.442695
    %v1155 = vpow.pop %v1154
    %v1156 = vadd.f32 %v1155, 1.0
    %v1157 = vrcp.pop %v1156
    %v1158 = vmul.f32 1.0, %v1157
    %v1159 = vmul.f32 %v1158, 2.0
    %v1160 = vsub.f32 %v1159, 1.0
    %v1161 = vmul.f32 %v1158, %v1098
    %1163 = vrot.lane.b32.xlu0 %v1160, 64
    %v1164 = vpop.permute.xlu0 %1163
    %v1166 = vmul.f32 %v1158, %v1164
    %1168 = vrot.lane.b32.xlu0 %v1166, 32
    %v1169 = vpop.permute.xlu0 %1168
    %v1171 = vadd.f32 %v1161, %v1169
    %v1172 = vtanh.pop %v1171
    %1174 = vrot.lane.b32.xlu0 %v1172, 64
    %v1175 = vpop.permute.xlu0 %1174
    %v1177 = vmul.f32 %v1158, %v1175
    %v1178 = vpack.c.bf16 %v1177, %v1177
    %1180 = vrot.lane.b32.xlu0 %v1178, 32
    %v1181 = vpop.permute.xlu0 %1180
    %v1183 = vsel %vm159, %v1181, 0
    %1185 = vmatprep.subr.bf16.mxu0 0
    %1186 = vmatpush1.bf16.msra.mxu0 %v155
    %1187 = vmatprep.subr.bf16.mxu0 0
    %1188 = vmatpush1.bf16.msra.mxu0 %v156
    %1189 = vmatprep.subr.bf16.mxu0 0
    %1190 = vmatpush1.bf16.msra.mxu0 0
    %1191 = vmatprep.subr.bf16.mxu0 0
    %1192 = vmatpush1.bf16.msra.mxu0 0
    %1193 = vmatprep.subr.bf16.mxu0 0
    %1194 = vmatpush1.bf16.msra.mxu0 0
    %1195 = vmatprep.subr.bf16.mxu0 0
    %1196 = vmatpush1.bf16.msra.mxu0 0
    %1197 = vmatprep.subr.bf16.mxu0 0
    %1198 = vmatpush1.bf16.msra.mxu0 0
    %1199 = vmatprep.subr.bf16.mxu0 0
    %1200 = vmatpush1.bf16.msra.mxu0 0
    %1201 = vmatprep.subr.bf16.mxu0 0
    %1202 = vmatpush1.bf16.msra.mxu0 0
    %1203 = vmatprep.subr.bf16.mxu0 0
    %1204 = vmatpush1.bf16.msra.mxu0 0
    %1205 = vmatprep.subr.bf16.mxu0 0
    %1206 = vmatpush1.bf16.msra.mxu0 0
    %1207 = vmatprep.subr.bf16.mxu0 0
    %1208 = vmatpush1.bf16.msra.mxu0 0
    %1209 = vmatprep.subr.bf16.mxu0 0
    %1210 = vmatpush1.bf16.msra.mxu0 0
    %1211 = vmatprep.subr.bf16.mxu0 0
    %1212 = vmatpush1.bf16.msra.mxu0 0
    %1213 = vmatprep.subr.bf16.mxu0 0
    %1214 = vmatpush1.bf16.msra.mxu0 0
    %1215 = vmatprep.subr.bf16.mxu0 0
    %1216 = vmatpush1.bf16.msra.mxu0 0
    %1217 = vmatprep.mubr.bf16.mxu0 0
    %1218 = vmatmul.mubr.bf16.gmra.mrb[0].mxu0 %v1183
    %v1219 = vpop.f32.mrb[0].mxu0
    %v1220 = vadd.f32 0.0, %v1219
    %v1221 = vpop.f32.mrb[0].mxu0
    %v1222 = vpop.f32.mrb[0].mxu0
    %v1223 = vpop.f32.mrb[0].mxu0
    %1224 = vdwg.mxu0
    %v1225 = vadd.f32 %v139, %v1220
    %v1226 = vxor.u32 %v1225, 2147483648
    %v1227 = vmul.f32 %v1226, 1.442695
    %v1228 = vpow.pop %v1227
    %v1229 = vadd.f32 %v1228, 1.0
    %v1230 = vrcp.pop %v1229
    %v1231 = vmul.f32 1.0, %v1230
    %v1232 = vmul.f32 %v1231, 2.0
    %v1233 = vsub.f32 %v1232, 1.0
    %v1234 = vmul.f32 %v1231, %v1171
    %1236 = vrot.lane.b32.xlu0 %v1233, 64
    %v1237 = vpop.permute.xlu0 %1236
    %v1239 = vmul.f32 %v1231, %v1237
    %1241 = vrot.lane.b32.xlu0 %v1239, 32
    %v1242 = vpop.permute.xlu0 %1241
    %v1244 = vadd.f32 %v1234, %v1242
    %v1245 = vtanh.pop %v1244
    %1247 = vrot.lane.b32.xlu0 %v1245, 64
    %v1248 = vpop.permute.xlu0 %1247
    %v1250 = vmul.f32 %v1231, %v1248
    %1252 = vrot.lane.b32.xlu0 %v228, 32
    %v1253 = vpop.permute.xlu0 %1252
    %1256 = vrot.lane.b32.xlu0 %v301, 64
    %v1257 = vpop.permute.xlu0 %1256
    %1260 = vrot.lane.b32.xlu0 %v374, 96
    %v1261 = vpop.permute.xlu0 %1260
    %1264 = vrot.lane.b32.xlu0 %v520, 32
    %v1265 = vpop.permute.xlu0 %1264
    %1268 = vrot.lane.b32.xlu0 %v593, 64
    %v1269 = vpop.permute.xlu0 %1268
    %1272 = vrot.lane.b32.xlu0 %v666, 96
    %v1273 = vpop.permute.xlu0 %1272
    %1276 = vrot.lane.b32.xlu0 %v812, 32
    %v1277 = vpop.permute.xlu0 %1276
    %1280 = vrot.lane.b32.xlu0 %v885, 64
    %v1281 = vpop.permute.xlu0 %1280
    %1284 = vrot.lane.b32.xlu0 %v958, 96
    %v1285 = vpop.permute.xlu0 %1284
    %1288 = vrot.lane.b32.xlu0 %v1104, 32
    %v1289 = vpop.permute.xlu0 %1288
    %1292 = vrot.lane.b32.xlu0 %v1177, 64
    %v1293 = vpop.permute.xlu0 %1292
    %1296 = vrot.lane.b32.xlu0 %v1250, 96
    %v1297 = vpop.permute.xlu0 %1296
    %v1299 = vsel %vm159, %v1253, %v1257
    %vm1300 = vcmask 523264
    %v1301 = vsel %vm1300, %v1299, %v1261
    %vm1302 = vcmask 785408
    %v1303 = vsel %vm1302, %v1301, %v447
    %v1304 = vsel %vm159, %v1265, %v1269
    %v1305 = vsel %vm1300, %v1304, %v1273
    %v1306 = vsel %vm1302, %v1305, %v739
    %v1307 = vsel %vm159, %v1277, %v1281
    %v1308 = vsel %vm1300, %v1307, %v1285
    %v1309 = vsel %vm1302, %v1308, %v1031
    %v1310 = vsel %vm159, %v1289, %v1293
    %v1311 = vsel %vm1300, %v1310, %v1297
    %v1312 = vsel %vm1302, %v1311, 0.0
    %1313 = vst [vmem:[#allocation8] sm:$0xff] %v1303
    %1314 = vst [vmem:[#allocation8 + $0x8] sm:$0xff] %v1306
    %1315 = vst [vmem:[#allocation8 + $0x10] sm:$0xff] %v1309
    %1316 = vst [vmem:[#allocation8 + $0x18] sm:$0xff] %v1312
    // Predicated region
    $region30: #{tpu_custom_call.1} parent=1 // pred_check
      _
    $region31: #{tpu_custom_call.1} parent=1 // pred_check_branch
      %1318 = sbr.rel (0) target = $region33
    $region32: #{tpu_custom_call.1} parent=1 // pred_region
      %s1320 = ssub.s32 512, 512
      %1321 = vsyncadd [#allocation4], %s1320
      %s1323 = sshll.u32 [#allocation8], 4
      %s1324 = int_to_ptr.vmem [resolvable:$true] %s1323
      %1326 = dma.vmem_to_hbm [thread:$0]  %s1324, 512, %s4, [#allocation4]
    $region33: #{tpu_custom_call.1} parent=1 // pred_fallthru
      _
    // Predicated region
    $region34: #{tpu_custom_call.1} parent=1 // pred_check
      _
    $region35: #{tpu_custom_call.1} parent=1 // pred_check_branch
      %1328 = sbr.rel (0) target = $region37
    $region36: #{tpu_custom_call.1} parent=1 // pred_region
      %1329 = dma.done [#allocation4], 512
    $region37: #{tpu_custom_call.1} parent=1 // pred_fallthru
      _
    %1330 = vsyncpa [#allocation3], 1
    %1331 = vsyncpa [#allocation6], 1
    %1332 = vsyncpa [#allocation4], 1

</llo_original>
